<compile_context>
chip_gen: v5e
topology: v5e:2x2
jax: 0.10.0
libtpu: 0.0.40
codegen_flags: <defaults>
</compile_context>

<pallas_src>
import functools

import jax
import jax.numpy as jnp
import numpy as np
from jax import lax
from jax.experimental import pallas as pl
from jax.experimental.pallas import tpu as pltpu

EPS = 1e-5  # nn.LayerNorm default


def _act(x):
    return jax.nn.gelu(x, approximate=True)


def _default_compute_dtype():
    """bf16 elementwise only on chips with bf16 VPU/EUP (v6e and newer)."""
    try:
        kind = jax.devices()[0].device_kind.lower()
    except Exception:  # pragma: no cover - no devices / non-TPU
        return jnp.float32
    if any(t in kind for t in ("v2", "v3", "v4", "v5")):
        return jnp.float32
    return jnp.bfloat16


def moe_kernel(x_ref, wg_ref, bg_ref,
               g1_ref, b1_ref, w1_ref, g2_ref, b2_ref, w2_ref, bias2_ref,
               o_ref,
               acc_ref, xhat_ref, wts_ref,
               *, num_experts, k, compute_dtype):
    e = pl.program_id(1)

    # ------- once per token tile: gate (f32) + hoisted LN1 stats -------
    @pl.when(e == 0)
    def _():
        x_f32 = x_ref[...].astype(jnp.float32)                       # (TM, D)

        # gate: softmax in f32 + dense top-k mask (first-occurrence tie-break,
        # like torch.topk).  If k == num_experts the final iteration re-selects
        # an already-taken column with an unchanged value, so still correct.
        logits = jnp.dot(x_f32, wg_ref[...],
                         preferred_element_type=jnp.float32) + bg_ref[...]
        logits = logits - jnp.max(logits, axis=-1, keepdims=True)
        expp = jnp.exp(logits)
        probs = expp / jnp.sum(expp, axis=-1, keepdims=True)          # (TM, E)

        col = lax.broadcasted_iota(jnp.int32, probs.shape, 1)
        weights = jnp.zeros_like(probs)
        remaining = probs
        for _ in range(k):
            m = jnp.max(remaining, axis=-1, keepdims=True)
            is_max = remaining == m
            first = jnp.min(jnp.where(is_max, col, num_experts), axis=-1,
                            keepdims=True)
            sel = col == first
            weights = jnp.where(sel, probs, weights)
            remaining = jnp.where(sel, -jnp.inf, remaining)
        wts_ref[...] = weights

        # LN1 statistics are expert-independent -> compute x_hat once.
        mu = jnp.mean(x_f32, axis=-1, keepdims=True)
        var = jnp.mean(x_f32 * x_f32, axis=-1, keepdims=True) - mu * mu
        xhat_ref[...] = ((x_f32 - mu) * lax.rsqrt(var + EPS)).astype(compute_dtype)

        acc_ref[...] = jnp.zeros_like(acc_ref)

    # ----------------- expert e FFN (dropout = identity) -----------------
    xhat = xhat_ref[...]                                              # (TM, D) compute dtype
    g1 = g1_ref[0].astype(compute_dtype)                              # (1, D)
    b1 = b1_ref[0].astype(compute_dtype)
    h = _act(xhat * g1 + b1)                                          # ln1 affine + act
    h = jnp.dot(h.astype(jnp.bfloat16), w1_ref[0],
                preferred_element_type=jnp.float32)                   # linear1 (no bias), (TM, I) f32

    mu2 = jnp.mean(h, axis=-1, keepdims=True)
    var2 = jnp.mean(h * h, axis=-1, keepdims=True) - mu2 * mu2
    hhat = ((h - mu2) * lax.rsqrt(var2 + EPS)).astype(compute_dtype)
    h = _act(hhat * g2_ref[0].astype(compute_dtype)
             + b2_ref[0].astype(compute_dtype))                       # ln2 affine + act
    h = jnp.dot(h.astype(jnp.bfloat16), w2_ref[0],
                preferred_element_type=jnp.float32) + bias2_ref[0]    # linear2, (TM, D) f32

    # weighted accumulate: pick this expert's gate score column (masked sum
    # over the tiny E lanes avoids a dynamic lane index).
    col_e = lax.broadcasted_iota(jnp.int32, wts_ref.shape, 1)
    w_e = jnp.sum(jnp.where(col_e == e, wts_ref[...], 0.0), axis=-1,
                  keepdims=True)                                      # (TM, 1)
    acc_ref[...] += w_e * h

    @pl.when(e == num_experts - 1)
    def _():
        o_ref[...] = acc_ref[...].astype(o_ref.dtype)


def token_mixing_moe(x, params, *, num_experts, k, tm=512, compute_dtype=None):
    bsz, n_heads, seq_len, head_dim = x.shape
    D = head_dim
    N = bsz * n_heads * seq_len
    I = params["w1"].shape[-1]
    E = num_experts

    if compute_dtype is None:
        compute_dtype = _default_compute_dtype()

    # Token tile: large (MXU/step-overhead friendly) but keep >= 2 tiles so the
    # "parallel" axis can shard across both TensorCores on v7x.
    half = ((max(N, 2) + 1) // 2 + 7) // 8 * 8
    tm_eff = max(8, min(tm, half))
    n_pad = (-N) % tm_eff
    x_flat = x.reshape(N, D)
    if n_pad:
        x_flat = jnp.concatenate(
            [x_flat, jnp.zeros((n_pad, D), x_flat.dtype)], axis=0)
    Npad = N + n_pad

    # Matmul weights streamed as bf16 (f32 accumulation in-kernel); gate stays
    # f32 so routing matches the f32 reference.  Per-expert vectors reshaped to
    # (E, 1, dim) so each expert's block is a clean (1, 1, dim) tile.
    wg = params["wg"].astype(jnp.float32)
    bg = params["bg"].astype(jnp.float32).reshape(1, E)
    w1 = params["w1"].astype(jnp.bfloat16)
    w2 = params["w2"].astype(jnp.bfloat16)
    g1 = params["g1"].reshape(E, 1, D).astype(compute_dtype)
    b1 = params["b1"].reshape(E, 1, D).astype(compute_dtype)
    g2 = params["g2"].reshape(E, 1, I).astype(compute_dtype)
    b2 = params["b2"].reshape(E, 1, I).astype(compute_dtype)
    bias2 = params["bias2"].reshape(E, 1, D).astype(jnp.float32)

    # Advisory cost estimate (matmul flops dominate).
    flops = 2 * Npad * E * (D * I + I * D) + 2 * Npad * D * E
    transcendentals = Npad * E * (D + I + 2) + Npad * E
    bytes_accessed = (
        2 * Npad * D * x_flat.dtype.itemsize
        + wg.size * 4 + bg.size * 4
        + (w1.size + w2.size) * 2
        + (g1.size + b1.size + g2.size + b2.size) * g1.dtype.itemsize
        + bias2.size * 4)

    out = pl.pallas_call(
        functools.partial(moe_kernel, num_experts=E, k=k,
                          compute_dtype=compute_dtype),
        out_shape=jax.ShapeDtypeStruct((Npad, D), x.dtype),
        grid=(Npad // tm_eff, E),
        in_specs=[
            pl.BlockSpec((tm_eff, D), lambda i, e: (i, 0)),      # x tile
            pl.BlockSpec((D, E),      lambda i, e: (0, 0)),      # gate W (f32)
            pl.BlockSpec((1, E),      lambda i, e: (0, 0)),      # gate b
            pl.BlockSpec((1, 1, D),   lambda i, e: (e, 0, 0)),   # ln1 gamma
            pl.BlockSpec((1, 1, D),   lambda i, e: (e, 0, 0)),   # ln1 beta
            pl.BlockSpec((1, D, I),   lambda i, e: (e, 0, 0)),   # linear1 W (bf16)
            pl.BlockSpec((1, 1, I),   lambda i, e: (e, 0, 0)),   # ln2 gamma
            pl.BlockSpec((1, 1, I),   lambda i, e: (e, 0, 0)),   # ln2 beta
            pl.BlockSpec((1, I, D),   lambda i, e: (e, 0, 0)),   # linear2 W (bf16)
            pl.BlockSpec((1, 1, D),   lambda i, e: (e, 0, 0)),   # linear2 b
        ],
        out_specs=pl.BlockSpec((tm_eff, D), lambda i, e: (i, 0)),
        scratch_shapes=[
            pltpu.VMEM((tm_eff, D), jnp.float32),    # accumulator
            pltpu.VMEM((tm_eff, D), compute_dtype),  # hoisted x_hat (LN1)
            pltpu.VMEM((tm_eff, E), jnp.float32),    # top-k gate weights
        ],
        compiler_params=pltpu.CompilerParams(
            dimension_semantics=("parallel", "arbitrary"),
            vmem_limit_bytes=48 * 1024 * 1024),
        cost_estimate=pl.CostEstimate(
            flops=flops, transcendentals=transcendentals,
            bytes_accessed=bytes_accessed),
    )(x_flat, wg, bg, g1, b1, w1, g2, b2, w2, bias2)

    if n_pad:
        out = out[:N]
    return out.reshape(bsz, n_heads, seq_len, D)


# ----------------------- pure-JAX reference -----------------------
def _layernorm_ref(x, gamma, beta):
    mu = jnp.mean(x, axis=-1, keepdims=True)
    var = jnp.mean(jnp.square(x - mu), axis=-1, keepdims=True)
    return (x - mu) * lax.rsqrt(var + EPS) * gamma + beta


def reference(x, params, *, num_experts, k):
    bsz, n_heads, seq_len, D = x.shape
    N = bsz * n_heads * seq_len
    xf = x.reshape(N, D).astype(jnp.float32)

    logits = xf @ params["wg"] + params["bg"]
    probs = jax.nn.softmax(logits, axis=-1)
    topv, topi = lax.top_k(probs, k)

    out = jnp.zeros((N, D), jnp.float32)
    for e in range(num_experts):
        h = _layernorm_ref(xf, params["g1"][e], params["b1"][e])
        h = _act(h)
        h = jnp.dot(h, params["w1"][e], precision=lax.Precision.HIGHEST)
        h = _layernorm_ref(h, params["g2"][e], params["b2"][e])
        h = _act(h)
        h = jnp.dot(h, params["w2"][e],
                    precision=lax.Precision.HIGHEST) + params["bias2"][e]
        we = jnp.zeros((N,), jnp.float32)
        for j in range(k):
            we = we + jnp.where(topi[:, j] == e, topv[:, j], 0.0)
        out = out + we[:, None] * h
    return out.astype(x.dtype).reshape(x.shape)


if __name__ == "__main__":
    bsz, n_heads, seq_len = 2, 2, 8
    hidden_dim, internal_dim = 128, 256
    num_experts, k = 4, 2

    key = jax.random.PRNGKey(0)
    ks = jax.random.split(key, 10)
    f32 = jnp.float32
    params = {
        "wg": 0.05 * jax.random.normal(ks[0], (hidden_dim, num_experts), f32),
        "bg": 0.05 * jax.random.normal(ks[1], (1, num_experts), f32),
        "g1": 1.0 + 0.1 * jax.random.normal(ks[2], (num_experts, hidden_dim), f32),
        "b1": 0.1 * jax.random.normal(ks[3], (num_experts, hidden_dim), f32),
        "w1": 0.05 * jax.random.normal(ks[4], (num_experts, hidden_dim, internal_dim), f32),
        "g2": 1.0 + 0.1 * jax.random.normal(ks[5], (num_experts, internal_dim), f32),
        "b2": 0.1 * jax.random.normal(ks[6], (num_experts, internal_dim), f32),
        "w2": 0.05 * jax.random.normal(ks[7], (num_experts, internal_dim, hidden_dim), f32),
        "bias2": 0.05 * jax.random.normal(ks[8], (num_experts, hidden_dim), f32),
    }
    x = jax.random.normal(ks[9], (bsz, n_heads, seq_len, hidden_dim), f32)

    out = token_mixing_moe(x, params, num_experts=num_experts, k=k)
    out = jax.block_until_ready(out)

    ref = jax.block_until_ready(reference(x, params, num_experts=num_experts, k=k))
    # Tolerance accounts for bf16 MXU operands (f32 accumulation) plus bf16
    # elementwise math on v6e/v7x vs the f32 HIGHEST-precision reference.
    np.testing.assert_allclose(np.asarray(out), np.asarray(ref),
                               rtol=3e-2, atol=3e-2)
    print("KERNEL_OK")
</pallas_src>

<mosaic_0001>
module attributes {stable_mosaic.version = 11 : i64} {
  func.func @moe_kernel(%arg0: i32, %arg1: i32, %arg2: memref<16x128xf32, #tpu.memory_space<vmem>>, %arg3: memref<128x4xf32, #tpu.memory_space<vmem>>, %arg4: memref<1x4xf32, #tpu.memory_space<vmem>>, %arg5: memref<1x1x128xbf16, #tpu.memory_space<vmem>>, %arg6: memref<1x1x128xbf16, #tpu.memory_space<vmem>>, %arg7: memref<1x128x256xbf16, #tpu.memory_space<vmem>>, %arg8: memref<1x1x256xbf16, #tpu.memory_space<vmem>>, %arg9: memref<1x1x256xbf16, #tpu.memory_space<vmem>>, %arg10: memref<1x256x128xbf16, #tpu.memory_space<vmem>>, %arg11: memref<1x1x128xf32, #tpu.memory_space<vmem>>, %arg12: memref<16x128xf32, #tpu.memory_space<vmem>>, %arg13: memref<16x128xf32, #tpu.memory_space<vmem>>, %arg14: memref<16x128xbf16, #tpu.memory_space<vmem>>, %arg15: memref<16x4xf32, #tpu.memory_space<vmem>>) attributes {dimension_semantics = [#tpu.dimension_semantics<parallel>, #tpu.dimension_semantics<arbitrary>], iteration_bounds = array<i64: 2, 4>, scalar_prefetch = 0 : i64, scratch_operands = 3 : i64, tpu.core_type = #tpu.core_type<tc>, window_params = [{transform_indices = @transform_0, window_bounds = array<i64: 16, 128>}, {pipeline_mode = #tpu.pipeline_mode<synchronous>, transform_indices = @transform_1, window_bounds = array<i64: 128, 4>}, {pipeline_mode = #tpu.pipeline_mode<synchronous>, transform_indices = @transform_2, window_bounds = array<i64: 1, 4>}, {transform_indices = @transform_3, window_bounds = array<i64: 1, 1, 128>}, {transform_indices = @transform_4, window_bounds = array<i64: 1, 1, 128>}, {transform_indices = @transform_5, window_bounds = array<i64: 1, 128, 256>}, {transform_indices = @transform_6, window_bounds = array<i64: 1, 1, 256>}, {transform_indices = @transform_7, window_bounds = array<i64: 1, 1, 256>}, {transform_indices = @transform_8, window_bounds = array<i64: 1, 256, 128>}, {transform_indices = @transform_9, window_bounds = array<i64: 1, 1, 128>}, {transform_indices = @transform_10, window_bounds = array<i64: 16, 128>}]} {
    %c0_i32 = arith.constant 0 : i32
    %0 = arith.cmpi eq, %arg1, %c0_i32 : i32
    %1 = arith.extui %0 : i1 to i32
    %c0_i32_0 = arith.constant 0 : i32
    %2 = arith.cmpi ne, %1, %c0_i32_0 : i32
    scf.if %2 {
      %c0_46 = arith.constant 0 : index
      %c0_47 = arith.constant 0 : index
      %91 = vector.load %arg2[%c0_46, %c0_47] : memref<16x128xf32, #tpu.memory_space<vmem>>, vector<16x128xf32>
      %c0_48 = arith.constant 0 : index
      %c0_49 = arith.constant 0 : index
      %92 = vector.load %arg3[%c0_48, %c0_49] : memref<128x4xf32, #tpu.memory_space<vmem>>, vector<128x4xf32>
      %cst_50 = arith.constant dense<0.000000e+00> : vector<16x4xf32>
      %93 = tpu.matmul %91, %92, %cst_50 {dimension_numbers = #tpu.dot_dimension_numbers<[1], [0], [0], [1], [0, 0, 1, 1], [], []>} : vector<16x128xf32>, vector<128x4xf32>, vector<16x4xf32> -> vector<16x4xf32>
      %c0_51 = arith.constant 0 : index
      %c0_52 = arith.constant 0 : index
      %94 = vector.load %arg4[%c0_51, %c0_52] : memref<1x4xf32, #tpu.memory_space<vmem>>, vector<1x4xf32>
      %95 = vector.broadcast %94 : vector<1x4xf32> to vector<16x4xf32>
      %96 = arith.addf %93, %95 : vector<16x4xf32>
      %cst_53 = arith.constant dense<0xFF800000> : vector<16xf32>
      %97 = vector.multi_reduction <maximumf>, %96, %cst_53 [1] : vector<16x4xf32> to vector<16xf32>
      %98 = vector.shape_cast %97 : vector<16xf32> to vector<16x1xf32>
      %99 = vector.broadcast %98 : vector<16x1xf32> to vector<16x4xf32>
      %100 = arith.subf %96, %99 : vector<16x4xf32>
      %101 = math.exp %100 : vector<16x4xf32>
      %cst_54 = arith.constant dense<0.000000e+00> : vector<16xf32>
      %102 = vector.multi_reduction <add>, %101, %cst_54 [1] : vector<16x4xf32> to vector<16xf32>
      %103 = vector.shape_cast %102 : vector<16xf32> to vector<16x1xf32>
      %104 = vector.broadcast %103 : vector<16x1xf32> to vector<16x4xf32>
      %105 = arith.divf %101, %104 : vector<16x4xf32>
      %106 = tpu.iota {dimensions = array<i32: 1>} : vector<16x4xi32>
      %cst_55 = arith.constant 0.000000e+00 : f32
      %107 = vector.broadcast %cst_55 : f32 to vector<16x4xf32>
      %cst_56 = arith.constant dense<0xFF800000> : vector<16xf32>
      %108 = vector.multi_reduction <maximumf>, %105, %cst_56 [1] : vector<16x4xf32> to vector<16xf32>
      %109 = vector.shape_cast %108 : vector<16xf32> to vector<16x1xf32>
      %110 = vector.broadcast %109 : vector<16x1xf32> to vector<16x4xf32>
      %111 = arith.cmpf oeq, %105, %110 : vector<16x4xf32>
      %c4_i32 = arith.constant 4 : i32
      %112 = vector.broadcast %c4_i32 : i32 to vector<16x4xi32>
      %113 = arith.select %111, %106, %112 : vector<16x4xi1>, vector<16x4xi32>
      %cst_57 = arith.constant dense<2147483647> : vector<16xi32>
      %114 = vector.multi_reduction <minsi>, %113, %cst_57 [1] : vector<16x4xi32> to vector<16xi32>
      %115 = vector.shape_cast %114 : vector<16xi32> to vector<16x1xi32>
      %116 = vector.broadcast %115 : vector<16x1xi32> to vector<16x4xi32>
      %117 = arith.cmpi eq, %106, %116 : vector<16x4xi32>
      %118 = arith.select %117, %105, %107 : vector<16x4xi1>, vector<16x4xf32>
      %cst_58 = arith.constant 0xFF800000 : f32
      %119 = vector.broadcast %cst_58 : f32 to vector<16x4xf32>
      %120 = arith.select %117, %119, %105 : vector<16x4xi1>, vector<16x4xf32>
      %cst_59 = arith.constant dense<0xFF800000> : vector<16xf32>
      %121 = vector.multi_reduction <maximumf>, %120, %cst_59 [1] : vector<16x4xf32> to vector<16xf32>
      %122 = vector.shape_cast %121 : vector<16xf32> to vector<16x1xf32>
      %123 = vector.broadcast %122 : vector<16x1xf32> to vector<16x4xf32>
      %124 = arith.cmpf oeq, %120, %123 : vector<16x4xf32>
      %c4_i32_60 = arith.constant 4 : i32
      %125 = vector.broadcast %c4_i32_60 : i32 to vector<16x4xi32>
      %126 = arith.select %124, %106, %125 : vector<16x4xi1>, vector<16x4xi32>
      %cst_61 = arith.constant dense<2147483647> : vector<16xi32>
      %127 = vector.multi_reduction <minsi>, %126, %cst_61 [1] : vector<16x4xi32> to vector<16xi32>
      %128 = vector.shape_cast %127 : vector<16xi32> to vector<16x1xi32>
      %129 = vector.broadcast %128 : vector<16x1xi32> to vector<16x4xi32>
      %130 = arith.cmpi eq, %106, %129 : vector<16x4xi32>
      %131 = arith.select %130, %105, %118 : vector<16x4xi1>, vector<16x4xf32>
      %c0_62 = arith.constant 0 : index
      %c0_63 = arith.constant 0 : index
      %132 = vector.load %arg15[%c0_62, %c0_63] : memref<16x4xf32, #tpu.memory_space<vmem>>, vector<16x4xf32>
      tpu.vector_store %arg15[%c0_62, %c0_63], %131 {strides = array<i32>} : memref<16x4xf32, #tpu.memory_space<vmem>>, vector<16x4xf32>,
      %cst_64 = arith.constant dense<0.000000e+00> : vector<16xf32>
      %133 = vector.multi_reduction <add>, %91, %cst_64 [1] : vector<16x128xf32> to vector<16xf32>
      %134 = vector.shape_cast %133 : vector<16xf32> to vector<16x1xf32>
      %cst_65 = arith.constant 1.280000e+02 : f32
      %135 = vector.broadcast %cst_65 : f32 to vector<16x1xf32>
      %136 = arith.divf %134, %135 : vector<16x1xf32>
      %137 = arith.mulf %91, %91 : vector<16x128xf32>
      %cst_66 = arith.constant dense<0.000000e+00> : vector<16xf32>
      %138 = vector.multi_reduction <add>, %137, %cst_66 [1] : vector<16x128xf32> to vector<16xf32>
      %139 = vector.shape_cast %138 : vector<16xf32> to vector<16x1xf32>
      %cst_67 = arith.constant 1.280000e+02 : f32
      %140 = vector.broadcast %cst_67 : f32 to vector<16x1xf32>
      %141 = arith.divf %139, %140 : vector<16x1xf32>
      %142 = arith.mulf %136, %136 : vector<16x1xf32>
      %143 = arith.subf %141, %142 : vector<16x1xf32>
      %144 = vector.broadcast %136 : vector<16x1xf32> to vector<16x128xf32>
      %145 = arith.subf %91, %144 : vector<16x128xf32>
      %cst_68 = arith.constant 9.99999974E-6 : f32
      %146 = vector.broadcast %cst_68 : f32 to vector<16x1xf32>
      %147 = arith.addf %143, %146 : vector<16x1xf32>
      %148 = math.rsqrt %147 : vector<16x1xf32>
      %149 = vector.broadcast %148 : vector<16x1xf32> to vector<16x128xf32>
      %150 = arith.mulf %145, %149 : vector<16x128xf32>
      %151 = arith.truncf %150 : vector<16x128xf32> to vector<16x128xbf16>
      %c0_69 = arith.constant 0 : index
      %c0_70 = arith.constant 0 : index
      %152 = vector.load %arg14[%c0_69, %c0_70] : memref<16x128xbf16, #tpu.memory_space<vmem>>, vector<16x128xbf16>
      tpu.vector_store %arg14[%c0_69, %c0_70], %151 {strides = array<i32>} : memref<16x128xbf16, #tpu.memory_space<vmem>>, vector<16x128xbf16>,
      %cst_71 = arith.constant 0.000000e+00 : f32
      %153 = vector.broadcast %cst_71 : f32 to vector<16x128xf32>
      %c0_72 = arith.constant 0 : index
      %c0_73 = arith.constant 0 : index
      %154 = vector.load %arg13[%c0_72, %c0_73] : memref<16x128xf32, #tpu.memory_space<vmem>>, vector<16x128xf32>
      tpu.vector_store %arg13[%c0_72, %c0_73], %153 {strides = array<i32>} : memref<16x128xf32, #tpu.memory_space<vmem>>, vector<16x128xf32>,
    } else {
    }
    %c0 = arith.constant 0 : index
    %c0_1 = arith.constant 0 : index
    %3 = vector.load %arg14[%c0, %c0_1] : memref<16x128xbf16, #tpu.memory_space<vmem>>, vector<16x128xbf16>
    %c0_2 = arith.constant 0 : index
    %c0_3 = arith.constant 0 : index
    %c0_4 = arith.constant 0 : index
    %4 = vector.load %arg5[%c0_2, %c0_3, %c0_4] : memref<1x1x128xbf16, #tpu.memory_space<vmem>>, vector<1x1x128xbf16>
    %5 = vector.shape_cast %4 : vector<1x1x128xbf16> to vector<1x128xbf16>
    %c0_5 = arith.constant 0 : index
    %c0_6 = arith.constant 0 : index
    %c0_7 = arith.constant 0 : index
    %6 = vector.load %arg6[%c0_5, %c0_6, %c0_7] : memref<1x1x128xbf16, #tpu.memory_space<vmem>>, vector<1x1x128xbf16>
    %7 = vector.shape_cast %6 : vector<1x1x128xbf16> to vector<1x128xbf16>
    %8 = vector.broadcast %5 : vector<1x128xbf16> to vector<16x128xbf16>
    %9 = arith.mulf %3, %8 : vector<16x128xbf16>
    %10 = vector.broadcast %7 : vector<1x128xbf16> to vector<16x128xbf16>
    %11 = arith.addf %9, %10 : vector<16x128xbf16>
    %12 = arith.mulf %11, %11 : vector<16x128xbf16>
    %13 = arith.mulf %11, %12 : vector<16x128xbf16>
    %cst = arith.constant 4.467770e-02 : bf16
    %14 = vector.broadcast %cst : bf16 to vector<16x128xbf16>
    %15 = arith.mulf %14, %13 : vector<16x128xbf16>
    %16 = arith.addf %11, %15 : vector<16x128xbf16>
    %cst_8 = arith.constant 7.968750e-01 : bf16
    %17 = vector.broadcast %cst_8 : bf16 to vector<16x128xbf16>
    %18 = arith.mulf %17, %16 : vector<16x128xbf16>
    %19 = math.tanh %18 : vector<16x128xbf16>
    %cst_9 = arith.constant 1.000000e+00 : bf16
    %20 = vector.broadcast %cst_9 : bf16 to vector<16x128xbf16>
    %21 = arith.addf %20, %19 : vector<16x128xbf16>
    %cst_10 = arith.constant 5.000000e-01 : bf16
    %22 = vector.broadcast %cst_10 : bf16 to vector<16x128xbf16>
    %23 = arith.mulf %22, %21 : vector<16x128xbf16>
    %24 = arith.mulf %11, %23 : vector<16x128xbf16>
    %c0_11 = arith.constant 0 : index
    %c0_12 = arith.constant 0 : index
    %c0_13 = arith.constant 0 : index
    %25 = vector.load %arg7[%c0_11, %c0_12, %c0_13] : memref<1x128x256xbf16, #tpu.memory_space<vmem>>, vector<1x128x256xbf16>
    %26 = vector.shape_cast %25 : vector<1x128x256xbf16> to vector<128x256xbf16>
    %cst_14 = arith.constant dense<0.000000e+00> : vector<16x256xf32>
    %27 = tpu.matmul %24, %26, %cst_14 {dimension_numbers = #tpu.dot_dimension_numbers<[1], [0], [0], [1], [0, 0, 1, 1], [], []>} : vector<16x128xbf16>, vector<128x256xbf16>, vector<16x256xf32> -> vector<16x256xf32>
    %cst_15 = arith.constant dense<0.000000e+00> : vector<16xf32>
    %28 = vector.multi_reduction <add>, %27, %cst_15 [1] : vector<16x256xf32> to vector<16xf32>
    %29 = vector.shape_cast %28 : vector<16xf32> to vector<16x1xf32>
    %cst_16 = arith.constant 2.560000e+02 : f32
    %30 = vector.broadcast %cst_16 : f32 to vector<16x1xf32>
    %31 = arith.divf %29, %30 : vector<16x1xf32>
    %32 = arith.mulf %27, %27 : vector<16x256xf32>
    %cst_17 = arith.constant dense<0.000000e+00> : vector<16xf32>
    %33 = vector.multi_reduction <add>, %32, %cst_17 [1] : vector<16x256xf32> to vector<16xf32>
    %34 = vector.shape_cast %33 : vector<16xf32> to vector<16x1xf32>
    %cst_18 = arith.constant 2.560000e+02 : f32
    %35 = vector.broadcast %cst_18 : f32 to vector<16x1xf32>
    %36 = arith.divf %34, %35 : vector<16x1xf32>
    %37 = arith.mulf %31, %31 : vector<16x1xf32>
    %38 = arith.subf %36, %37 : vector<16x1xf32>
    %39 = vector.broadcast %31 : vector<16x1xf32> to vector<16x256xf32>
    %40 = arith.subf %27, %39 : vector<16x256xf32>
    %cst_19 = arith.constant 9.99999974E-6 : f32
    %41 = vector.broadcast %cst_19 : f32 to vector<16x1xf32>
    %42 = arith.addf %38, %41 : vector<16x1xf32>
    %43 = math.rsqrt %42 : vector<16x1xf32>
    %44 = vector.broadcast %43 : vector<16x1xf32> to vector<16x256xf32>
    %45 = arith.mulf %40, %44 : vector<16x256xf32>
    %46 = arith.truncf %45 : vector<16x256xf32> to vector<16x256xbf16>
    %c0_20 = arith.constant 0 : index
    %c0_21 = arith.constant 0 : index
    %c0_22 = arith.constant 0 : index
    %47 = vector.load %arg8[%c0_20, %c0_21, %c0_22] : memref<1x1x256xbf16, #tpu.memory_space<vmem>>, vector<1x1x256xbf16>
    %48 = vector.shape_cast %47 : vector<1x1x256xbf16> to vector<1x256xbf16>
    %49 = vector.broadcast %48 : vector<1x256xbf16> to vector<16x256xbf16>
    %50 = arith.mulf %46, %49 : vector<16x256xbf16>
    %c0_23 = arith.constant 0 : index
    %c0_24 = arith.constant 0 : index
    %c0_25 = arith.constant 0 : index
    %51 = vector.load %arg9[%c0_23, %c0_24, %c0_25] : memref<1x1x256xbf16, #tpu.memory_space<vmem>>, vector<1x1x256xbf16>
    %52 = vector.shape_cast %51 : vector<1x1x256xbf16> to vector<1x256xbf16>
    %53 = vector.broadcast %52 : vector<1x256xbf16> to vector<16x256xbf16>
    %54 = arith.addf %50, %53 : vector<16x256xbf16>
    %55 = arith.mulf %54, %54 : vector<16x256xbf16>
    %56 = arith.mulf %54, %55 : vector<16x256xbf16>
    %cst_26 = arith.constant 4.467770e-02 : bf16
    %57 = vector.broadcast %cst_26 : bf16 to vector<16x256xbf16>
    %58 = arith.mulf %57, %56 : vector<16x256xbf16>
    %59 = arith.addf %54, %58 : vector<16x256xbf16>
    %cst_27 = arith.constant 7.968750e-01 : bf16
    %60 = vector.broadcast %cst_27 : bf16 to vector<16x256xbf16>
    %61 = arith.mulf %60, %59 : vector<16x256xbf16>
    %62 = math.tanh %61 : vector<16x256xbf16>
    %cst_28 = arith.constant 1.000000e+00 : bf16
    %63 = vector.broadcast %cst_28 : bf16 to vector<16x256xbf16>
    %64 = arith.addf %63, %62 : vector<16x256xbf16>
    %cst_29 = arith.constant 5.000000e-01 : bf16
    %65 = vector.broadcast %cst_29 : bf16 to vector<16x256xbf16>
    %66 = arith.mulf %65, %64 : vector<16x256xbf16>
    %67 = arith.mulf %54, %66 : vector<16x256xbf16>
    %c0_30 = arith.constant 0 : index
    %c0_31 = arith.constant 0 : index
    %c0_32 = arith.constant 0 : index
    %68 = vector.load %arg10[%c0_30, %c0_31, %c0_32] : memref<1x256x128xbf16, #tpu.memory_space<vmem>>, vector<1x256x128xbf16>
    %69 = vector.shape_cast %68 : vector<1x256x128xbf16> to vector<256x128xbf16>
    %cst_33 = arith.constant dense<0.000000e+00> : vector<16x128xf32>
    %70 = tpu.matmul %67, %69, %cst_33 {dimension_numbers = #tpu.dot_dimension_numbers<[1], [0], [0], [1], [0, 0, 1, 1], [], []>} : vector<16x256xbf16>, vector<256x128xbf16>, vector<16x128xf32> -> vector<16x128xf32>
    %c0_34 = arith.constant 0 : index
    %c0_35 = arith.constant 0 : index
    %c0_36 = arith.constant 0 : index
    %71 = vector.load %arg11[%c0_34, %c0_35, %c0_36] : memref<1x1x128xf32, #tpu.memory_space<vmem>>, vector<1x1x128xf32>
    %72 = vector.shape_cast %71 : vector<1x1x128xf32> to vector<1x128xf32>
    %73 = vector.broadcast %72 : vector<1x128xf32> to vector<16x128xf32>
    %74 = arith.addf %70, %73 : vector<16x128xf32>
    %75 = tpu.iota {dimensions = array<i32: 1>} : vector<16x4xi32>
    %76 = vector.broadcast %arg1 : i32 to vector<16x4xi32>
    %77 = arith.cmpi eq, %75, %76 : vector<16x4xi32>
    %c0_37 = arith.constant 0 : index
    %c0_38 = arith.constant 0 : index
    %78 = vector.load %arg15[%c0_37, %c0_38] : memref<16x4xf32, #tpu.memory_space<vmem>>, vector<16x4xf32>
    %cst_39 = arith.constant 0.000000e+00 : f32
    %79 = vector.broadcast %cst_39 : f32 to vector<16x4xf32>
    %80 = arith.select %77, %78, %79 : vector<16x4xi1>, vector<16x4xf32>
    %cst_40 = arith.constant dense<0.000000e+00> : vector<16xf32>
    %81 = vector.multi_reduction <add>, %80, %cst_40 [1] : vector<16x4xf32> to vector<16xf32>
    %82 = vector.shape_cast %81 : vector<16xf32> to vector<16x1xf32>
    %c0_41 = arith.constant 0 : index
    %c0_42 = arith.constant 0 : index
    %83 = vector.load %arg13[%c0_41, %c0_42] : memref<16x128xf32, #tpu.memory_space<vmem>>, vector<16x128xf32>
    %84 = vector.broadcast %82 : vector<16x1xf32> to vector<16x128xf32>
    %85 = arith.mulf %84, %74 : vector<16x128xf32>
    %86 = arith.addf %83, %85 : vector<16x128xf32>
    %c0_43 = arith.constant 0 : index
    %c0_44 = arith.constant 0 : index
    %87 = vector.load %arg13[%c0_43, %c0_44] : memref<16x128xf32, #tpu.memory_space<vmem>>, vector<16x128xf32>
    tpu.vector_store %arg13[%c0_43, %c0_44], %86 {strides = array<i32>} : memref<16x128xf32, #tpu.memory_space<vmem>>, vector<16x128xf32>,
    %c3_i32 = arith.constant 3 : i32
    %88 = arith.cmpi eq, %arg1, %c3_i32 : i32
    %89 = arith.extui %88 : i1 to i32
    %c0_i32_45 = arith.constant 0 : i32
    %90 = arith.cmpi ne, %89, %c0_i32_45 : i32
    scf.if %90 {
      %c0_46 = arith.constant 0 : index
      %c0_47 = arith.constant 0 : index
      %91 = vector.load %arg13[%c0_46, %c0_47] : memref<16x128xf32, #tpu.memory_space<vmem>>, vector<16x128xf32>
      %c0_48 = arith.constant 0 : index
      %c0_49 = arith.constant 0 : index
      %92 = vector.load %arg12[%c0_48, %c0_49] : memref<16x128xf32, #tpu.memory_space<vmem>>, vector<16x128xf32>
      tpu.vector_store %arg12[%c0_48, %c0_49], %91 {strides = array<i32>} : memref<16x128xf32, #tpu.memory_space<vmem>>, vector<16x128xf32>,
    } else {
    }
    return
  }
  func.func @transform_0(%arg0: i32, %arg1: i32) -> (i32, i32) {
    %c0_i32 = arith.constant 0 : i32
    %c0_i32_0 = arith.constant 0 : i32
    return %arg0, %c0_i32 : i32, i32
  }
  func.func @transform_1(%arg0: i32, %arg1: i32) -> (i32, i32) {
    %c0_i32 = arith.constant 0 : i32
    %c0_i32_0 = arith.constant 0 : i32
    %c0_i32_1 = arith.constant 0 : i32
    return %c0_i32, %c0_i32_0 : i32, i32
  }
  func.func @transform_2(%arg0: i32, %arg1: i32) -> (i32, i32) {
    %c0_i32 = arith.constant 0 : i32
    %c0_i32_0 = arith.constant 0 : i32
    %c0_i32_1 = arith.constant 0 : i32
    return %c0_i32, %c0_i32_0 : i32, i32
  }
  func.func @transform_3(%arg0: i32, %arg1: i32) -> (i32, i32, i32) {
    %c0_i32 = arith.constant 0 : i32
    %c0_i32_0 = arith.constant 0 : i32
    %c0_i32_1 = arith.constant 0 : i32
    return %arg1, %c0_i32, %c0_i32_0 : i32, i32, i32
  }
  func.func @transform_4(%arg0: i32, %arg1: i32) -> (i32, i32, i32) {
    %c0_i32 = arith.constant 0 : i32
    %c0_i32_0 = arith.constant 0 : i32
    %c0_i32_1 = arith.constant 0 : i32
    return %arg1, %c0_i32, %c0_i32_0 : i32, i32, i32
  }
  func.func @transform_5(%arg0: i32, %arg1: i32) -> (i32, i32, i32) {
    %c0_i32 = arith.constant 0 : i32
    %c0_i32_0 = arith.constant 0 : i32
    %c0_i32_1 = arith.constant 0 : i32
    return %arg1, %c0_i32, %c0_i32_0 : i32, i32, i32
  }
  func.func @transform_6(%arg0: i32, %arg1: i32) -> (i32, i32, i32) {
    %c0_i32 = arith.constant 0 : i32
    %c0_i32_0 = arith.constant 0 : i32
    %c0_i32_1 = arith.constant 0 : i32
    return %arg1, %c0_i32, %c0_i32_0 : i32, i32, i32
  }
  func.func @transform_7(%arg0: i32, %arg1: i32) -> (i32, i32, i32) {
    %c0_i32 = arith.constant 0 : i32
    %c0_i32_0 = arith.constant 0 : i32
    %c0_i32_1 = arith.constant 0 : i32
    return %arg1, %c0_i32, %c0_i32_0 : i32, i32, i32
  }
  func.func @transform_8(%arg0: i32, %arg1: i32) -> (i32, i32, i32) {
    %c0_i32 = arith.constant 0 : i32
    %c0_i32_0 = arith.constant 0 : i32
    %c0_i32_1 = arith.constant 0 : i32
    return %arg1, %c0_i32, %c0_i32_0 : i32, i32, i32
  }
  func.func @transform_9(%arg0: i32, %arg1: i32) -> (i32, i32, i32) {
    %c0_i32 = arith.constant 0 : i32
    %c0_i32_0 = arith.constant 0 : i32
    %c0_i32_1 = arith.constant 0 : i32
    return %arg1, %c0_i32, %c0_i32_0 : i32, i32, i32
  }
  func.func @transform_10(%arg0: i32, %arg1: i32) -> (i32, i32) {
    %c0_i32 = arith.constant 0 : i32
    %c0_i32_0 = arith.constant 0 : i32
    return %arg0, %c0_i32 : i32, i32
  }
}

</mosaic_0001>

<llo_original>
// kernel: tpu_custom_call.1
$region0: #{tpu_custom_call.1}
  #allocation0 [shape = 'u32[]', space=smem, size = 0x4, offset = 0x4, fixed_abs, tag = 'smem constant byte address 0x4 - core index']
  #allocation1 [shape = 'u32[72,128]{1,0:T(1,128)}', space=vmem, size = 0x9000, scoped, tag = 'internal scratch']
  #allocation2 [shape = 'f32[16,128]{1,0:T(8,128)}', space=vmem, size = 0x2000, scoped, tag = 'scratch operand']
  #allocation3 [shape = 'bf16[16,128]{1,0:T(8,128)(2,1)}', space=vmem, size = 0x1000, scoped, tag = 'scratch operand']
  #allocation4 [shape = 'f32[16,4]{1,0:T(8,128)}', space=vmem, size = 0x2000, scoped, tag = 'scratch operand']
  %s0 = inlined_call_operand.vmem [shape: f32[32,128], index: 0, kind: input, shape index: {}]
  %s1 = inlined_call_operand.vmem [shape: f32[128,4], index: 1, kind: input, shape index: {}]
  %s2 = inlined_call_operand.vmem [shape: f32[1,4], index: 2, kind: input, shape index: {}]
  %s3 = inlined_call_operand.vmem [shape: bf16[4,1,128], index: 3, kind: input, shape index: {}]
  %s4 = inlined_call_operand.vmem [shape: bf16[4,1,128], index: 4, kind: input, shape index: {}]
  %s5 = inlined_call_operand.hbm [shape: bf16[4,128,256], index: 5, kind: input, shape index: {}]
  %s6 = inlined_call_operand.vmem [shape: bf16[4,1,256], index: 6, kind: input, shape index: {}]
  %s7 = inlined_call_operand.vmem [shape: bf16[4,1,256], index: 7, kind: input, shape index: {}]
  %s8 = inlined_call_operand.hbm [shape: bf16[4,256,128], index: 8, kind: input, shape index: {}]
  %s9 = inlined_call_operand.vmem [shape: f32[4,1,128], index: 9, kind: input, shape index: {}]
  %s10 = inlined_call_operand.hbm [shape: f32[32,128], index: 10, kind: output, shape index: {}]
  %s11 = sld [smem:[#allocation0]]
  $region89: #{tpu_custom_call.1} parent=0
    _
  %s13 = ssub.s32 1, %s11
  %s14 = scalar_select 0, %s13, %s11
  $region1: #{tpu_custom_call.1} parent=0
    #allocation5 [shape = 'u8[131072]{0}', space=vmem, size = 0x20000, scoped, tag = 'input window, operand 5']
    #allocation6 [shape = 's32[2]{0}', space=sflag, size = 0x8, scoped, tag = 'scoped memory for tpu_custom_call.1']
    #allocation7 [shape = 's32[2]{0}', space=sflag, size = 0x8, scoped, tag = 'scoped memory for tpu_custom_call.1']
    #allocation8 [shape = 'u8[131072]{0}', space=vmem, size = 0x20000, scoped, tag = 'input window, operand 8']
    #allocation9 [shape = 's32[2]{0}', space=sflag, size = 0x8, scoped, tag = 'scoped memory for tpu_custom_call.1']
    #allocation10 [shape = 'u8[16384]{0}', space=vmem, size = 0x4000, scoped, tag = 'output window, operand 0']
    %15 = vsyncpa [#allocation6], 0
    %s16 = scalar_lea.sflag [#allocation6], 1
    %17 = vsyncpa %s16, 0
    %18 = vsyncpa [#allocation9], 0
    %s19 = scalar_lea.sflag [#allocation9], 1
    %20 = vsyncpa %s19, 0
    %21 = vsyncpa [#allocation7], 0
    %s22 = scalar_lea.sflag [#allocation7], 1
    %23 = vsyncpa %s22, 0
    loop: start=0, step=1, limit=10
    $region2: #{tpu_custom_call.1} parent=1 // loop_pre_header
      _
    $region3: #{tpu_custom_call.1} parent=1 // loop_header
      %s25 = sphi 0, %s29
      %p26 = scmp.ge.s32.totalorder %s25, 10
      %s32 = sphi 0, %s44
      %s33 = sphi 0, %s40
      %s34 = sphi 0, %s32
      %s35 = sphi 0, %s33
      %s36 = sphi 0, %s34
      %s37 = sphi 0, %s35
      %s47 = sphi 0, %s49
      %s50 = sphi 0, %s47
      %s51 = sphi 0, %s50
      %s67 = sphi 0, %s51
      %s71 = sphi 0, %s71
      %s73 = sphi 0, %s71
      %s74 = sphi 0, %s73
      %s88 = sphi 0, %s74
      %s92 = sphi 0, %s92
      %s94 = sphi 0, %s92
      %s95 = sphi 0, %s94
      %s109 = sphi 0, %s95
      %s115 = sphi 0, %s117
      %s118 = sphi 0, %s115
      %s119 = sphi 0, %s118
      %s135 = sphi 0, %s119
      %s141 = sphi 0, %s143
      %s144 = sphi 0, %s141
      %s145 = sphi 0, %s144
      %s161 = sphi 0, %s145
      %s167 = sphi 0, %s169
      %s170 = sphi 0, %s167
      %s171 = sphi 0, %s170
      %s187 = sphi 0, %s171
      %s193 = sphi 0, %s195
      %s196 = sphi 0, %s193
      %s197 = sphi 0, %s196
      %s213 = sphi 0, %s197
      %s219 = sphi 0, %s221
      %s222 = sphi 0, %s219
      %s223 = sphi 0, %s222
      %s239 = sphi 0, %s223
      %s245 = sphi 0, %s247
      %s248 = sphi 0, %s245
      %s249 = sphi 0, %s248
      %s265 = sphi 0, %s249
      %s271 = sphi 0, %s273
      %s274 = sphi 0, %s271
      %s275 = sphi 0, %s274
      %s291 = sphi 0, %s275
      %s297 = sphi 0, %s299
      %s300 = sphi 0, %s297
      %s301 = sphi 0, %s300
      %s317 = sphi 0, %s301
    $region4: #{tpu_custom_call.1} parent=1 // loop_header_branch
      %28 = sbr.rel (%p26) target = $region8
    $region5: #{tpu_custom_call.1} parent=1 // loop_body
      %s30 = ssub.s32 %s25, 1
      %s31 = ssub.s32 %s25, 2
      %s38 = sadd.s32 1, %s33
      %p39 = scmp.ge.s32.totalorder %s38, 4
      %s40 = scalar_select %p39, 0, %s38
      %s41 = sadd.s32 1, %s32
      %s42 = scalar_select %p39, %s41, %s32
      %p43 = scmp.ge.s32.totalorder %s42, 2
      %s44 = scalar_select %p43, 0, %s42
      %s45 = ssub.s32 %s32, %s44
      %p46 = scmp.eq.s32.totalorder %s45, 0
      %s48 = sadd.s32 %s47, 1
      %s49 = scalar_select %p46, %s47, %s48
      %p52 = pneg %p46
      %p53 = scmp.eq.s32.totalorder %s25, 7
      %p54 = por %p52, %p53
      %p55 = scmp.ne.s32.totalorder %s47, %s50
      %p56 = scmp.eq.s32.totalorder %s25, 0
      %p57 = por %p55, %p56
      %p58 = scmp.ne.s32.totalorder %s47, %s50
      %p59 = scmp.eq.s32.totalorder %s30, 7
      %p60 = por %p58, %p59
      %p61 = scmp.ne.s32.totalorder %s50, %s51
      %p62 = scmp.eq.s32.totalorder %s30, 0
      %p63 = por %p61, %p62
      %p64 = scmp.ne.s32.totalorder %s50, %s51
      %p65 = scmp.eq.s32.totalorder %s31, 7
      %p66 = por %p64, %p65
      %p68 = scmp.ne.s32.totalorder %s51, %s67
      %p69 = scmp.eq.s32.totalorder %s31, 0
      %p70 = por %p68, %p69
      %s72 = sadd.s32 %s71, 1
      %p75 = scmp.eq.s32.totalorder %s25, 7
      %p76 = scmp.ne.s32.totalorder %s71, %s73
      %p77 = scmp.eq.s32.totalorder %s25, 0
      %p78 = por %p76, %p77
      %p79 = scmp.ne.s32.totalorder %s71, %s73
      %p80 = scmp.eq.s32.totalorder %s30, 7
      %p81 = por %p79, %p80
      %p82 = scmp.ne.s32.totalorder %s73, %s74
      %p83 = scmp.eq.s32.totalorder %s30, 0
      %p84 = por %p82, %p83
      %p85 = scmp.ne.s32.totalorder %s73, %s74
      %p86 = scmp.eq.s32.totalorder %s31, 7
      %p87 = por %p85, %p86
      %p89 = scmp.ne.s32.totalorder %s74, %s88
      %p90 = scmp.eq.s32.totalorder %s31, 0
      %p91 = por %p89, %p90
      %s93 = sadd.s32 %s92, 1
      %p96 = scmp.eq.s32.totalorder %s25, 7
      %p97 = scmp.ne.s32.totalorder %s92, %s94
      %p98 = scmp.eq.s32.totalorder %s25, 0
      %p99 = por %p97, %p98
      %p100 = scmp.ne.s32.totalorder %s92, %s94
      %p101 = scmp.eq.s32.totalorder %s30, 7
      %p102 = por %p100, %p101
      %p103 = scmp.ne.s32.totalorder %s94, %s95
      %p104 = scmp.eq.s32.totalorder %s30, 0
      %p105 = por %p103, %p104
      %p106 = scmp.ne.s32.totalorder %s94, %s95
      %p107 = scmp.eq.s32.totalorder %s31, 7
      %p108 = por %p106, %p107
      %p110 = scmp.ne.s32.totalorder %s95, %s109
      %p111 = scmp.eq.s32.totalorder %s31, 0
      %p112 = por %p110, %p111
      %s113 = ssub.s32 %s33, %s40
      %p114 = scmp.eq.s32.totalorder %s113, 0
      %s116 = sadd.s32 %s115, 1
      %s117 = scalar_select %p114, %s115, %s116
      %p120 = pneg %p114
      %p121 = scmp.eq.s32.totalorder %s25, 7
      %p122 = por %p120, %p121
      %p123 = scmp.ne.s32.totalorder %s115, %s118
      %p124 = scmp.eq.s32.totalorder %s25, 0
      %p125 = por %p123, %p124
      %p126 = scmp.ne.s32.totalorder %s115, %s118
      %p127 = scmp.eq.s32.totalorder %s30, 7
      %p128 = por %p126, %p127
      %p129 = scmp.ne.s32.totalorder %s118, %s119
      %p130 = scmp.eq.s32.totalorder %s30, 0
      %p131 = por %p129, %p130
      %p132 = scmp.ne.s32.totalorder %s118, %s119
      %p133 = scmp.eq.s32.totalorder %s31, 7
      %p134 = por %p132, %p133
      %p136 = scmp.ne.s32.totalorder %s119, %s135
      %p137 = scmp.eq.s32.totalorder %s31, 0
      %p138 = por %p136, %p137
      %s139 = ssub.s32 %s33, %s40
      %p140 = scmp.eq.s32.totalorder %s139, 0
      %s142 = sadd.s32 %s141, 1
      %s143 = scalar_select %p140, %s141, %s142
      %p146 = pneg %p140
      %p147 = scmp.eq.s32.totalorder %s25, 7
      %p148 = por %p146, %p147
      %p149 = scmp.ne.s32.totalorder %s141, %s144
      %p150 = scmp.eq.s32.totalorder %s25, 0
      %p151 = por %p149, %p150
      %p152 = scmp.ne.s32.totalorder %s141, %s144
      %p153 = scmp.eq.s32.totalorder %s30, 7
      %p154 = por %p152, %p153
      %p155 = scmp.ne.s32.totalorder %s144, %s145
      %p156 = scmp.eq.s32.totalorder %s30, 0
      %p157 = por %p155, %p156
      %p158 = scmp.ne.s32.totalorder %s144, %s145
      %p159 = scmp.eq.s32.totalorder %s31, 7
      %p160 = por %p158, %p159
      %p162 = scmp.ne.s32.totalorder %s145, %s161
      %p163 = scmp.eq.s32.totalorder %s31, 0
      %p164 = por %p162, %p163
      %s165 = ssub.s32 %s33, %s40
      %p166 = scmp.eq.s32.totalorder %s165, 0
      %s168 = sadd.s32 %s167, 1
      %s169 = scalar_select %p166, %s167, %s168
      %p172 = pneg %p166
      %p173 = scmp.eq.s32.totalorder %s25, 7
      %p174 = por %p172, %p173
      %p175 = scmp.ne.s32.totalorder %s167, %s170
      %p176 = scmp.eq.s32.totalorder %s25, 0
      %p177 = por %p175, %p176
      %p178 = scmp.ne.s32.totalorder %s167, %s170
      %p179 = scmp.eq.s32.totalorder %s30, 7
      %p180 = por %p178, %p179
      %p181 = scmp.ne.s32.totalorder %s170, %s171
      %p182 = scmp.eq.s32.totalorder %s30, 0
      %p183 = por %p181, %p182
      %p184 = scmp.ne.s32.totalorder %s170, %s171
      %p185 = scmp.eq.s32.totalorder %s31, 7
      %p186 = por %p184, %p185
      %p188 = scmp.ne.s32.totalorder %s171, %s187
      %p189 = scmp.eq.s32.totalorder %s31, 0
      %p190 = por %p188, %p189
      %s191 = ssub.s32 %s33, %s40
      %p192 = scmp.eq.s32.totalorder %s191, 0
      %s194 = sadd.s32 %s193, 1
      %s195 = scalar_select %p192, %s193, %s194
      %p198 = pneg %p192
      %p199 = scmp.eq.s32.totalorder %s25, 7
      %p200 = por %p198, %p199
      %p201 = scmp.ne.s32.totalorder %s193, %s196
      %p202 = scmp.eq.s32.totalorder %s25, 0
      %p203 = por %p201, %p202
      %p204 = scmp.ne.s32.totalorder %s193, %s196
      %p205 = scmp.eq.s32.totalorder %s30, 7
      %p206 = por %p204, %p205
      %p207 = scmp.ne.s32.totalorder %s196, %s197
      %p208 = scmp.eq.s32.totalorder %s30, 0
      %p209 = por %p207, %p208
      %p210 = scmp.ne.s32.totalorder %s196, %s197
      %p211 = scmp.eq.s32.totalorder %s31, 7
      %p212 = por %p210, %p211
      %p214 = scmp.ne.s32.totalorder %s197, %s213
      %p215 = scmp.eq.s32.totalorder %s31, 0
      %p216 = por %p214, %p215
      %s217 = ssub.s32 %s33, %s40
      %p218 = scmp.eq.s32.totalorder %s217, 0
      %s220 = sadd.s32 %s219, 1
      %s221 = scalar_select %p218, %s219, %s220
      %p224 = pneg %p218
      %p225 = scmp.eq.s32.totalorder %s25, 7
      %p226 = por %p224, %p225
      %p227 = scmp.ne.s32.totalorder %s219, %s222
      %p228 = scmp.eq.s32.totalorder %s25, 0
      %p229 = por %p227, %p228
      %p230 = scmp.ne.s32.totalorder %s219, %s222
      %p231 = scmp.eq.s32.totalorder %s30, 7
      %p232 = por %p230, %p231
      %p233 = scmp.ne.s32.totalorder %s222, %s223
      %p234 = scmp.eq.s32.totalorder %s30, 0
      %p235 = por %p233, %p234
      %p236 = scmp.ne.s32.totalorder %s222, %s223
      %p237 = scmp.eq.s32.totalorder %s31, 7
      %p238 = por %p236, %p237
      %p240 = scmp.ne.s32.totalorder %s223, %s239
      %p241 = scmp.eq.s32.totalorder %s31, 0
      %p242 = por %p240, %p241
      %s243 = ssub.s32 %s33, %s40
      %p244 = scmp.eq.s32.totalorder %s243, 0
      %s246 = sadd.s32 %s245, 1
      %s247 = scalar_select %p244, %s245, %s246
      %p250 = pneg %p244
      %p251 = scmp.eq.s32.totalorder %s25, 7
      %p252 = por %p250, %p251
      %p253 = scmp.ne.s32.totalorder %s245, %s248
      %p254 = scmp.eq.s32.totalorder %s25, 0
      %p255 = por %p253, %p254
      %p256 = scmp.ne.s32.totalorder %s245, %s248
      %p257 = scmp.eq.s32.totalorder %s30, 7
      %p258 = por %p256, %p257
      %p259 = scmp.ne.s32.totalorder %s248, %s249
      %p260 = scmp.eq.s32.totalorder %s30, 0
      %p261 = por %p259, %p260
      %p262 = scmp.ne.s32.totalorder %s248, %s249
      %p263 = scmp.eq.s32.totalorder %s31, 7
      %p264 = por %p262, %p263
      %p266 = scmp.ne.s32.totalorder %s249, %s265
      %p267 = scmp.eq.s32.totalorder %s31, 0
      %p268 = por %p266, %p267
      %s269 = ssub.s32 %s33, %s40
      %p270 = scmp.eq.s32.totalorder %s269, 0
      %s272 = sadd.s32 %s271, 1
      %s273 = scalar_select %p270, %s271, %s272
      %p276 = pneg %p270
      %p277 = scmp.eq.s32.totalorder %s25, 7
      %p278 = por %p276, %p277
      %p279 = scmp.ne.s32.totalorder %s271, %s274
      %p280 = scmp.eq.s32.totalorder %s25, 0
      %p281 = por %p279, %p280
      %p282 = scmp.ne.s32.totalorder %s271, %s274
      %p283 = scmp.eq.s32.totalorder %s30, 7
      %p284 = por %p282, %p283
      %p285 = scmp.ne.s32.totalorder %s274, %s275
      %p286 = scmp.eq.s32.totalorder %s30, 0
      %p287 = por %p285, %p286
      %p288 = scmp.ne.s32.totalorder %s274, %s275
      %p289 = scmp.eq.s32.totalorder %s31, 7
      %p290 = por %p288, %p289
      %p292 = scmp.ne.s32.totalorder %s275, %s291
      %p293 = scmp.eq.s32.totalorder %s31, 0
      %p294 = por %p292, %p293
      %s295 = ssub.s32 %s32, %s44
      %p296 = scmp.eq.s32.totalorder %s295, 0
      %s298 = sadd.s32 %s297, 1
      %s299 = scalar_select %p296, %s297, %s298
      %p302 = pneg %p296
      %p303 = scmp.eq.s32.totalorder %s25, 7
      %p304 = por %p302, %p303
      %p305 = scmp.ne.s32.totalorder %s297, %s300
      %p306 = scmp.eq.s32.totalorder %s25, 0
      %p307 = por %p305, %p306
      %p308 = scmp.ne.s32.totalorder %s297, %s300
      %p309 = scmp.eq.s32.totalorder %s30, 7
      %p310 = por %p308, %p309
      %p311 = scmp.ne.s32.totalorder %s300, %s301
      %p312 = scmp.eq.s32.totalorder %s30, 0
      %p313 = por %p311, %p312
      %p314 = scmp.ne.s32.totalorder %s300, %s301
      %p315 = scmp.eq.s32.totalorder %s31, 7
      %p316 = por %p314, %p315
      %p318 = scmp.ne.s32.totalorder %s301, %s317
      %p319 = scmp.eq.s32.totalorder %s31, 0
      %p320 = por %p318, %p319
      %p321 = scmp.le.s32.totalorder 1, %s25
      %p322 = scmp.lt.s32.totalorder %s25, 9
      %p323 = pnand %p321, %p322
      %p324 = pneg %p323
      // Predicated region
      $region9: #{tpu_custom_call.1} parent=5 // pred_check
        _
      $region10: #{tpu_custom_call.1} parent=5 // pred_check_branch
        %326 = sbr.rel (%p323) target = $region12
      $region11: #{tpu_custom_call.1} parent=5 // pred_region
        %s327 = ssub.s32 %s25, 1
        // Predicated region
        $region13: #{tpu_custom_call.1} parent=11 // pred_check
          %p328 = pneg %p84
        $region14: #{tpu_custom_call.1} parent=11 // pred_check_branch
          %330 = sbr.rel (%p328) target = $region16
        $region15: #{tpu_custom_call.1} parent=11 // pred_region
          _
        $region16: #{tpu_custom_call.1} parent=11 // pred_fallthru
          _
        // Predicated region
        $region17: #{tpu_custom_call.1} parent=11 // pred_check
          %p331 = pneg %p105
        $region18: #{tpu_custom_call.1} parent=11 // pred_check_branch
          %333 = sbr.rel (%p331) target = $region20
        $region19: #{tpu_custom_call.1} parent=11 // pred_region
          _
        $region20: #{tpu_custom_call.1} parent=11 // pred_fallthru
          _
      $region12: #{tpu_custom_call.1} parent=5 // pred_fallthru
        _
      %p334 = scmp.lt.s32.totalorder %s25, 8
      // Predicated region
      $region21: #{tpu_custom_call.1} parent=5 // pred_check
        %p335 = pneg %p334
      $region22: #{tpu_custom_call.1} parent=5 // pred_check_branch
        %337 = sbr.rel (%p335) target = $region24
      $region23: #{tpu_custom_call.1} parent=5 // pred_region
        // Predicated region
        $region25: #{tpu_custom_call.1} parent=23 // pred_check
          %p338 = pneg %p57
        $region26: #{tpu_custom_call.1} parent=23 // pred_check_branch
          %340 = sbr.rel (%p338) target = $region28
        $region27: #{tpu_custom_call.1} parent=23 // pred_region
          %s341 = smul.u32 2, %s32
          %p342 = scmp.lt.s32.totalorder %s341, 3
          %s343 = scalar_select %p342, %s341, 3
          %s344 = smul.addr %s343, 8
          %s345 = scalar_lea.vmem %s0, %s344
          %s346 = smul.u32 2, %s32
        $region28: #{tpu_custom_call.1} parent=23 // pred_fallthru
          _
        // Predicated region
        $region29: #{tpu_custom_call.1} parent=23 // pred_check
          %p347 = pneg %p125
        $region30: #{tpu_custom_call.1} parent=23 // pred_check_branch
          %349 = sbr.rel (%p347) target = $region32
        $region31: #{tpu_custom_call.1} parent=23 // pred_region
          %p350 = scmp.lt.s32.totalorder %s33, 3
          %s351 = scalar_select %p350, %s33, 3
          %s352 = scalar_lea.vmem %s3, %s351
        $region32: #{tpu_custom_call.1} parent=23 // pred_fallthru
          _
        // Predicated region
        $region33: #{tpu_custom_call.1} parent=23 // pred_check
          %p353 = pneg %p151
        $region34: #{tpu_custom_call.1} parent=23 // pred_check_branch
          %355 = sbr.rel (%p353) target = $region36
        $region35: #{tpu_custom_call.1} parent=23 // pred_region
          %p356 = scmp.lt.s32.totalorder %s33, 3
          %s357 = scalar_select %p356, %s33, 3
          %s358 = scalar_lea.vmem %s4, %s357
        $region36: #{tpu_custom_call.1} parent=23 // pred_fallthru
          _
        // Predicated region
        $region37: #{tpu_custom_call.1} parent=23 // pred_check
          %p359 = pneg %p177
        $region38: #{tpu_custom_call.1} parent=23 // pred_check_branch
          %361 = sbr.rel (%p359) target = $region40
        $region39: #{tpu_custom_call.1} parent=23 // pred_region
          %s362 = sand.u32 %s167, 1
          %s363 = scalar_lea.sflag [#allocation6], %s362
          %s364 = sand.u32 %s167, 1
          %s365 = smul.addr %s364, 128
          %s366 = scalar_lea.vmem [#allocation5], %s365
          %368 = vsyncadd %s363, 0
          %s369 = smul.addr %s33, 32
          %s370 = smul.addr %s369, 4
          %s371 = scalar_lea.hbm %s5, %s370
          %s372 = sshll.u32 %s371, 4
          %s373 = int_to_ptr.hbm [resolvable:$true] %s372
          %s374 = sshll.u32 %s366, 4
          %s375 = int_to_ptr.vmem [resolvable:$true] %s374
          %380 = dma.hbm_to_vmem [thread:$0]  %s373, 2048, %s375, %s363, 128, 128, 8
        $region40: #{tpu_custom_call.1} parent=23 // pred_fallthru
          _
        // Predicated region
        $region41: #{tpu_custom_call.1} parent=23 // pred_check
          %p381 = pneg %p203
        $region42: #{tpu_custom_call.1} parent=23 // pred_check_branch
          %383 = sbr.rel (%p381) target = $region44
        $region43: #{tpu_custom_call.1} parent=23 // pred_region
          %p384 = scmp.lt.s32.totalorder %s33, 3
          %s385 = scalar_select %p384, %s33, 3
          %s386 = smul.addr %s385, 2
          %s387 = scalar_lea.vmem %s6, %s386
        $region44: #{tpu_custom_call.1} parent=23 // pred_fallthru
          _
        // Predicated region
        $region45: #{tpu_custom_call.1} parent=23 // pred_check
          %p388 = pneg %p229
        $region46: #{tpu_custom_call.1} parent=23 // pred_check_branch
          %390 = sbr.rel (%p388) target = $region48
        $region47: #{tpu_custom_call.1} parent=23 // pred_region
          %p391 = scmp.lt.s32.totalorder %s33, 3
          %s392 = scalar_select %p391, %s33, 3
          %s393 = smul.addr %s392, 2
          %s394 = scalar_lea.vmem %s7, %s393
        $region48: #{tpu_custom_call.1} parent=23 // pred_fallthru
          _
        // Predicated region
        $region49: #{tpu_custom_call.1} parent=23 // pred_check
          %p395 = pneg %p255
        $region50: #{tpu_custom_call.1} parent=23 // pred_check_branch
          %397 = sbr.rel (%p395) target = $region52
        $region51: #{tpu_custom_call.1} parent=23 // pred_region
          %s398 = sand.u32 %s245, 1
          %s399 = scalar_lea.sflag [#allocation9], %s398
          %s400 = sand.u32 %s245, 1
          %s401 = smul.addr %s400, 128
          %s402 = scalar_lea.vmem [#allocation8], %s401
          %404 = vsyncadd %s399, 0
          %s405 = smul.addr %s33, 32
          %s406 = smul.addr %s405, 4
          %s407 = scalar_lea.hbm %s8, %s406
          %s408 = sshll.u32 %s407, 4
          %s409 = int_to_ptr.hbm [resolvable:$true] %s408
          %s410 = sshll.u32 %s402, 4
          %s411 = int_to_ptr.vmem [resolvable:$true] %s410
          %416 = dma.hbm_to_vmem [thread:$0]  %s409, 2048, %s411, %s399, 64, 64, 4
        $region52: #{tpu_custom_call.1} parent=23 // pred_fallthru
          _
        // Predicated region
        $region53: #{tpu_custom_call.1} parent=23 // pred_check
          %p417 = pneg %p281
        $region54: #{tpu_custom_call.1} parent=23 // pred_check_branch
          %419 = sbr.rel (%p417) target = $region56
        $region55: #{tpu_custom_call.1} parent=23 // pred_region
          %p420 = scmp.lt.s32.totalorder %s33, 3
          %s421 = scalar_select %p420, %s33, 3
          %s422 = scalar_lea.vmem %s9, %s421
        $region56: #{tpu_custom_call.1} parent=23 // pred_fallthru
          _
      $region24: #{tpu_custom_call.1} parent=5 // pred_fallthru
        _
      %p423 = scmp.le.s32.totalorder 1, %s25
      %p424 = scmp.lt.s32.totalorder %s25, 9
      %p425 = pnand %p423, %p424
      %p426 = pneg %p425
      // Predicated region
      $region57: #{tpu_custom_call.1} parent=5 // pred_check
        _
      $region58: #{tpu_custom_call.1} parent=5 // pred_check_branch
        %428 = sbr.rel (%p425) target = $region60
      $region59: #{tpu_custom_call.1} parent=5 // pred_region
        %s429 = ssub.s32 %s25, 1
        %s430 = sand.u32 %s170, 1
        %s431 = scalar_lea.sflag [#allocation6], %s430
        %s432 = sand.u32 %s170, 1
        %s433 = smul.addr %s432, 128
        %s434 = scalar_lea.vmem [#allocation5], %s433
        // Predicated region
        $region61: #{tpu_custom_call.1} parent=59 // pred_check
          %p435 = pneg %p183
        $region62: #{tpu_custom_call.1} parent=59 // pred_check_branch
          %437 = sbr.rel (%p435) target = $region64
        $region63: #{tpu_custom_call.1} parent=59 // pred_region
          %439 = dma.done %s431, 2048
        $region64: #{tpu_custom_call.1} parent=59 // pred_fallthru
          _
        %s440 = sand.u32 %s248, 1
        %s441 = scalar_lea.sflag [#allocation9], %s440
        %s442 = sand.u32 %s248, 1
        %s443 = smul.addr %s442, 128
        %s444 = scalar_lea.vmem [#allocation8], %s443
        // Predicated region
        $region65: #{tpu_custom_call.1} parent=59 // pred_check
          %p445 = pneg %p261
        $region66: #{tpu_custom_call.1} parent=59 // pred_check_branch
          %447 = sbr.rel (%p445) target = $region68
        $region67: #{tpu_custom_call.1} parent=59 // pred_region
          %449 = dma.done %s441, 2048
        $region68: #{tpu_custom_call.1} parent=59 // pred_fallthru
          _
        %s450 = smul.u32 2, %s34
        %p451 = scmp.lt.s32.totalorder %s450, 3
        %s452 = scalar_select %p451, %s450, 3
        %s453 = smul.addr %s452, 8
        %s454 = scalar_lea.vmem %s0, %s453
        %p455 = pneg %p63
        %p456 = pneg %p60
        %p457 = pneg %p84
        %p458 = pneg %p81
        %p459 = pneg %p105
        %p460 = pneg %p102
        %p461 = scmp.lt.s32.totalorder %s35, 3
        %s462 = scalar_select %p461, %s35, 3
        %s463 = scalar_lea.vmem %s3, %s462
        %p464 = pneg %p131
        %p465 = pneg %p128
        %p466 = scmp.lt.s32.totalorder %s35, 3
        %s467 = scalar_select %p466, %s35, 3
        %s468 = scalar_lea.vmem %s4, %s467
        %p469 = pneg %p157
        %p470 = pneg %p154
        %s471 = sand.u32 %s170, 1
        %s472 = scalar_lea.sflag [#allocation6], %s471
        %s473 = sand.u32 %s170, 1
        %s474 = smul.addr %s473, 128
        %s475 = scalar_lea.vmem [#allocation5], %s474
        %p476 = pneg %p183
        %p477 = pneg %p180
        %p478 = scmp.lt.s32.totalorder %s35, 3
        %s479 = scalar_select %p478, %s35, 3
        %s480 = smul.addr %s479, 2
        %s481 = scalar_lea.vmem %s6, %s480
        %p482 = pneg %p209
        %p483 = pneg %p206
        %p484 = scmp.lt.s32.totalorder %s35, 3
        %s485 = scalar_select %p484, %s35, 3
        %s486 = smul.addr %s485, 2
        %s487 = scalar_lea.vmem %s7, %s486
        %p488 = pneg %p235
        %p489 = pneg %p232
        %s490 = sand.u32 %s248, 1
        %s491 = scalar_lea.sflag [#allocation9], %s490
        %s492 = sand.u32 %s248, 1
        %s493 = smul.addr %s492, 128
        %s494 = scalar_lea.vmem [#allocation8], %s493
        %p495 = pneg %p261
        %p496 = pneg %p258
        %p497 = scmp.lt.s32.totalorder %s35, 3
        %s498 = scalar_select %p497, %s35, 3
        %s499 = scalar_lea.vmem %s9, %s498
        %p500 = pneg %p287
        %p501 = pneg %p284
        %p502 = pneg %p313
        %p503 = pneg %p310
        %s504 = sand.u32 %s300, 1
        %s505 = scalar_lea.sflag [#allocation7], %s504
        %s506 = sand.u32 %s300, 1
        %s507 = smul.addr %s506, 16
        %s508 = scalar_lea.vmem [#allocation10], %s507
        %s509 = smul.u32 2, %s34
        %p510 = scmp.lt.s32.totalorder %s509, 3
        %s511 = scalar_select %p510, %s509, 3
        %s512 = smul.addr %s511, 8
        %s513 = scalar_lea.vmem %s0, %s512
        %s514 = smul.u32 2, %s34
        %p515 = scmp.lt.s32.totalorder %s35, 3
        %s516 = scalar_select %p515, %s35, 3
        %s517 = scalar_lea.vmem %s3, %s516
        %p518 = scmp.lt.s32.totalorder %s35, 3
        %s519 = scalar_select %p518, %s35, 3
        %s520 = scalar_lea.vmem %s4, %s519
        %p521 = scmp.lt.s32.totalorder %s35, 3
        %s522 = scalar_select %p521, %s35, 3
        %s523 = smul.addr %s522, 2
        %s524 = scalar_lea.vmem %s6, %s523
        %p525 = scmp.lt.s32.totalorder %s35, 3
        %s526 = scalar_select %p525, %s35, 3
        %s527 = smul.addr %s526, 2
        %s528 = scalar_lea.vmem %s7, %s527
        %p529 = scmp.lt.s32.totalorder %s35, 3
        %s530 = scalar_select %p529, %s35, 3
        %s531 = scalar_lea.vmem %s9, %s530
        %s532 = smul.u32 2, %s34
        %p533 = scmp.eq.s32.totalorder %s35, 0
        // Predicated region
        $region69: #{tpu_custom_call.1} parent=59 // pred_check
          %p534 = pneg %p533
        $region70: #{tpu_custom_call.1} parent=59 // pred_check_branch
          %536 = sbr.rel (%p534) target = $region72
        $region71: #{tpu_custom_call.1} parent=59 // pred_region
          %v537 = vld [vmem:[%s513] sm:$0xff]
          %v538 = vld [vmem:[%s513 + $0x8] sm:$0xff]
          %v539 = vld [vmem:[%s1] sm:$0xff]
          %v540 = vld [vmem:[%s1 + $0x8] sm:$0xff]
          %v541 = vld [vmem:[%s1 + $0x10] sm:$0xff]
          %v542 = vld [vmem:[%s1 + $0x18] sm:$0xff]
          %v543 = vld [vmem:[%s1 + $0x20] sm:$0xff]
          %v544 = vld [vmem:[%s1 + $0x28] sm:$0xff]
          %v545 = vld [vmem:[%s1 + $0x30] sm:$0xff]
          %v546 = vld [vmem:[%s1 + $0x38] sm:$0xff]
          %v547 = vld [vmem:[%s1 + $0x40] sm:$0xff]
          %v548 = vld [vmem:[%s1 + $0x48] sm:$0xff]
          %v549 = vld [vmem:[%s1 + $0x50] sm:$0xff]
          %v550 = vld [vmem:[%s1 + $0x58] sm:$0xff]
          %v551 = vld [vmem:[%s1 + $0x60] sm:$0xff]
          %v552 = vld [vmem:[%s1 + $0x68] sm:$0xff]
          %v553 = vld [vmem:[%s1 + $0x70] sm:$0xff]
          %v554 = vld [vmem:[%s1 + $0x78] sm:$0xff]
          %v555 = vld [vmem:[%s2] sm:$0x1]
          %v557 = vperm.slane %v555, 0
          %559 = vmatpush.msra.mxu0 %v554
          %560 = vmatpush.msra.mxu0 %v553
          %561 = vmatpush.msra.mxu0 %v552
          %562 = vmatpush.msra.mxu0 %v551
          %563 = vmatpush.msra.mxu0 %v550
          %564 = vmatpush.msra.mxu0 %v549
          %565 = vmatpush.msra.mxu0 %v548
          %566 = vmatpush.msra.mxu0 %v547
          %567 = vmatpush.msra.mxu0 %v546
          %568 = vmatpush.msra.mxu0 %v545
          %569 = vmatpush.msra.mxu0 %v544
          %570 = vmatpush.msra.mxu0 %v543
          %571 = vmatpush.msra.mxu0 %v542
          %572 = vmatpush.msra.mxu0 %v541
          %573 = vmatpush.msra.mxu0 %v540
          %574 = vmatpush.msra.mxu0 %v539
          %575 = vmatmul.f32.gmra.mxu0 %v537
          %v576 = vpop.f32.mrf.mxu0
          %v577 = vadd.f32 %v557, %v576
          %578 = vmatmul.f32.gmra.mxu0 %v538
          %v579 = vpop.f32.mrf.mxu0
          %v580 = vadd.f32 %v557, %v579
          %581 = vdwg.mxu0
          %vm582 = vcmask 31744
          %v583 = vsel %vm582, %v577, -inf
          %584 = vmax.xlane.f32.xlu0 %v583
          %v585 = vpop.xlane.xlu0 %584
          %v586 = vsel %vm582, %v580, -inf
          %587 = vmax.xlane.f32.xlu0 %v586
          %v588 = vpop.xlane.xlu0 %587
          %v589 = vsub.f32 %v577, %v585
          %v590 = vsub.f32 %v580, %v588
          %v591 = vmul.f32 %v589, 1.442695
          %v592 = vpow.pop %v591
          %v593 = vmul.f32 %v590, 1.442695
          %v594 = vpow.pop %v593
          %v595 = vsel %vm582, %v592, 0.0
          %596 = vadd.xlane.f32.xlu0 %v595
          %v597 = vpop.xlane.xlu0 %596
          %v598 = vsel %vm582, %v594, 0.0
          %599 = vadd.xlane.f32.xlu0 %v598
          %v600 = vpop.xlane.xlu0 %599
          %v601 = vrcp.pop %v597
          %v602 = vmul.f32 %v597, %v601
          %v603 = vsub.f32 1.0, %v602
          %v604 = vmul.f32 %v601, %v603
          %v605 = vadd.f32 %v601, %v604
          %vm606 = vweird.f32 %v597
          %vm607 = vweird.f32 %v601
          %vm608 = vmor %vm606, %vm607
          %v609 = vsel %vm608, %v601, %v605
          %v610 = vand.u32 2147483647, %v597
          %vm611 = vcmp.eq.f32.partialorder %v610, 8.507059e+37
          %v612 = vand.u32 %v597, 2147483648
          %v613 = vor.u32 1.1754944e-38, %v612
          %v614 = vsel %vm611, %v613, %v609
          %v615 = vmul.f32 %v592, %v614
          %v616 = vrcp.pop %v600
          %v617 = vmul.f32 %v600, %v616
          %v618 = vsub.f32 1.0, %v617
          %v619 = vmul.f32 %v616, %v618
          %v620 = vadd.f32 %v616, %v619
          %vm621 = vweird.f32 %v600
          %vm622 = vweird.f32 %v616
          %vm623 = vmor %vm621, %vm622
          %v624 = vsel %vm623, %v616, %v620
          %v625 = vand.u32 2147483647, %v600
          %vm626 = vcmp.eq.f32.partialorder %v625, 8.507059e+37
          %v627 = vand.u32 %v600, 2147483648
          %v628 = vor.u32 1.1754944e-38, %v627
          %v629 = vsel %vm626, %v628, %v624
          %v630 = vmul.f32 %v594, %v629
          %v631 = vlaneseq
          %v632 = vand.u32 %v631, 127
          %v633 = vsel %vm582, %v615, -inf
          %634 = vmax.xlane.f32.xlu0 %v633
          %v635 = vpop.xlane.xlu0 %634
          %v636 = vsel %vm582, %v630, -inf
          %637 = vmax.xlane.f32.xlu0 %v636
          %v638 = vpop.xlane.xlu0 %637
          %vm639 = vcmp.eq.f32.partialorder %v615, %v635
          %vm640 = vcmp.eq.f32.partialorder %v630, %v638
          %v641 = vsel %vm639, %v632, 4
          %v642 = vsel %vm640, %v632, 4
          %v643 = vsel %vm582, %v641, 2147483647
          %v644 = vand.u32 %v643, 65535
          %v645 = vshra.s32 %v643, 16
          %v646 = vcvt.s32.f32 %v644
          %v647 = vcvt.s32.f32 %v645
          %648 = vmin.xlane.f32.xlu0 %v647
          %v649 = vpop.xlane.xlu0 %648
          %vm650 = vcmp.eq.f32.partialorder %v647, %v649
          %v651 = vsel %vm650, %v646, inf
          %652 = vmin.xlane.f32.xlu0 %v651
          %v653 = vpop.xlane.xlu0 %652
          %v654 = vcvt.f32.s32 %v653
          %v655 = vcvt.f32.s32 %v649
          %v656 = vshll.u32 %v655, 16
          %v657 = vadd.s32 %v656, %v654
          %v658 = vsel %vm582, %v642, 2147483647
          %v659 = vand.u32 %v658, 65535
          %v660 = vshra.s32 %v658, 16
          %v661 = vcvt.s32.f32 %v659
          %v662 = vcvt.s32.f32 %v660
          %663 = vmin.xlane.f32.xlu0 %v662
          %v664 = vpop.xlane.xlu0 %663
          %vm665 = vcmp.eq.f32.partialorder %v662, %v664
          %v666 = vsel %vm665, %v661, inf
          %667 = vmin.xlane.f32.xlu0 %v666
          %v668 = vpop.xlane.xlu0 %667
          %v669 = vcvt.f32.s32 %v668
          %v670 = vcvt.f32.s32 %v664
          %v671 = vshll.u32 %v670, 16
          %v672 = vadd.s32 %v671, %v669
          %vm673 = vcmp.eq.s32.totalorder %v632, %v657
          %vm674 = vcmp.eq.s32.totalorder %v632, %v672
          %v675 = vsel %vm673, %v615, 0.0
          %v676 = vsel %vm674, %v630, 0.0
          %v677 = vsel %vm673, -inf, %v615
          %v678 = vsel %vm674, -inf, %v630
          %v679 = vsel %vm582, %v677, -inf
          %680 = vmax.xlane.f32.xlu0 %v679
          %v681 = vpop.xlane.xlu0 %680
          %v682 = vsel %vm582, %v678, -inf
          %683 = vmax.xlane.f32.xlu0 %v682
          %v684 = vpop.xlane.xlu0 %683
          %vm685 = vcmp.eq.f32.partialorder %v677, %v681
          %vm686 = vcmp.eq.f32.partialorder %v678, %v684
          %v687 = vsel %vm685, %v632, 4
          %v688 = vsel %vm686, %v632, 4
          %v689 = vsel %vm582, %v687, 2147483647
          %v690 = vand.u32 %v689, 65535
          %v691 = vshra.s32 %v689, 16
          %v692 = vcvt.s32.f32 %v690
          %v693 = vcvt.s32.f32 %v691
          %694 = vmin.xlane.f32.xlu0 %v693
          %v695 = vpop.xlane.xlu0 %694
          %vm696 = vcmp.eq.f32.partialorder %v693, %v695
          %v697 = vsel %vm696, %v692, inf
          %698 = vmin.xlane.f32.xlu0 %v697
          %v699 = vpop.xlane.xlu0 %698
          %v700 = vcvt.f32.s32 %v699
          %v701 = vcvt.f32.s32 %v695
          %v702 = vshll.u32 %v701, 16
          %v703 = vadd.s32 %v702, %v700
          %v704 = vsel %vm582, %v688, 2147483647
          %v705 = vand.u32 %v704, 65535
          %v706 = vshra.s32 %v704, 16
          %v707 = vcvt.s32.f32 %v705
          %v708 = vcvt.s32.f32 %v706
          %709 = vmin.xlane.f32.xlu0 %v708
          %v710 = vpop.xlane.xlu0 %709
          %vm711 = vcmp.eq.f32.partialorder %v708, %v710
          %v712 = vsel %vm711, %v707, inf
          %713 = vmin.xlane.f32.xlu0 %v712
          %v714 = vpop.xlane.xlu0 %713
          %v715 = vcvt.f32.s32 %v714
          %v716 = vcvt.f32.s32 %v710
          %v717 = vshll.u32 %v716, 16
          %v718 = vadd.s32 %v717, %v715
          %vm719 = vcmp.eq.s32.totalorder %v632, %v703
          %vm720 = vcmp.eq.s32.totalorder %v632, %v718
          %v721 = vsel %vm719, %v615, %v675
          %v722 = vsel %vm720, %v630, %v676
          %723 = vst.msk [vmem:[#allocation4] sm:$0xff] %vm582, %v721
          %724 = vst.msk [vmem:[#allocation4 + $0x8] sm:$0xff] %vm582, %v722
          %725 = vadd.xlane.f32.xlu0 %v537
          %v726 = vpop.xlane.xlu0 %725
          %727 = vadd.xlane.f32.xlu0 %v538
          %v728 = vpop.xlane.xlu0 %727
          %v729 = vrcp.pop 128.0
          %v730 = vmul.f32 128.0, %v729
          %v731 = vsub.f32 1.0, %v730
          %v732 = vmul.f32 %v729, %v731
          %v733 = vadd.f32 %v729, %v732
          %vm734 = vweird.f32 %v729
          %v735 = vsel %vm734, %v729, %v733
          %v736 = vmul.f32 %v726, %v735
          %v737 = vmul.f32 %v728, %v735
          %v738 = vmul.f32 %v537, %v537
          %v739 = vmul.f32 %v538, %v538
          %740 = vadd.xlane.f32.xlu0 %v738
          %v741 = vpop.xlane.xlu0 %740
          %742 = vadd.xlane.f32.xlu0 %v739
          %v743 = vpop.xlane.xlu0 %742
          %v744 = vmul.f32 %v741, %v735
          %v745 = vmul.f32 %v743, %v735
          %v746 = vmul.f32 %v736, %v736
          %v747 = vmul.f32 %v737, %v737
          %v748 = vsub.f32 %v744, %v746
          %v749 = vsub.f32 %v745, %v747
          %v750 = vsub.f32 %v537, %v736
          %v751 = vsub.f32 %v538, %v737
          %v752 = vadd.f32 %v748, 1e-05
          %v753 = vadd.f32 %v749, 1e-05
          %v754 = vrsqrt.pop %v752
          %v755 = vmul.f32 %v754, %v752
          %v756 = vmul.f32 %v755, %v754
          %v757 = vmul.f32 0.5, %v756
          %v758 = vsub.f32 1.5, %v757
          %v759 = vmul.f32 %v754, %v758
          %vm760 = vweird.f32 %v752
          %vm761 = vweird.f32 %v754
          %vm762 = vmor %vm760, %vm761
          %v763 = vsel %vm762, %v754, %v759
          %v764 = vrsqrt.pop %v753
          %v765 = vmul.f32 %v764, %v753
          %v766 = vmul.f32 %v765, %v764
          %v767 = vmul.f32 0.5, %v766
          %v768 = vsub.f32 1.5, %v767
          %v769 = vmul.f32 %v764, %v768
          %vm770 = vweird.f32 %v753
          %vm771 = vweird.f32 %v764
          %vm772 = vmor %vm770, %vm771
          %v773 = vsel %vm772, %v764, %v769
          %v774 = vmul.f32 %v750, %v763
          %v775 = vmul.f32 %v751, %v773
          %v776 = vpack.c.bf16 %v774, %v774
          %v777 = vpack.c.bf16 %v775, %v775
          %778 = vst [vmem:[#allocation3] sm:$0xf] %v776
          %779 = vst [vmem:[#allocation3 + $0x4] sm:$0xf] %v777
          %780 = vst [vmem:[#allocation2] sm:$0xff] 0.0
          %781 = vst [vmem:[#allocation2 + $0x8] sm:$0xff] 0.0
        $region72: #{tpu_custom_call.1} parent=59 // pred_fallthru
          _
        %v782 = vld [vmem:[#allocation3] sm:$0xf]
        %v783 = vld [vmem:[#allocation3 + $0x4] sm:$0xf]
        %v784 = vld [vmem:[%s517] sm:$0x1]
        %v785 = vld [vmem:[%s520] sm:$0x1]
        %v787 = vpack.i.b16 %v784, %v784
        %v789 = vperm.slane %v787, 0
        %v790 = vunpack.c.l.bf16 %v782
        %v791 = vunpack.c.l.bf16 %v783
        %v792 = vunpack.c.l.bf16 %v789
        %v793 = vmul.f32 %v790, %v792
        %v794 = vmul.f32 %v791, %v792
        %v795 = vpack.c.bf16 %v793, %v793
        %v796 = vpack.c.bf16 %v794, %v794
        %v798 = vpack.i.b16 %v785, %v785
        %v800 = vperm.slane %v798, 0
        %v801 = vunpack.c.l.bf16 %v795
        %v802 = vunpack.c.l.bf16 %v796
        %v803 = vunpack.c.l.bf16 %v800
        %v804 = vadd.f32 %v801, %v803
        %v805 = vadd.f32 %v802, %v803
        %v806 = vpack.c.bf16 %v804, %v804
        %v807 = vpack.c.bf16 %v805, %v805
        %v808 = vunpack.c.l.bf16 %v806
        %v809 = vunpack.c.l.bf16 %v807
        %v810 = vmul.f32 %v808, %v808
        %v811 = vmul.f32 %v809, %v809
        %v812 = vpack.c.bf16 %v810, %v810
        %v813 = vpack.c.bf16 %v811, %v811
        %v814 = vunpack.c.l.bf16 %v812
        %v815 = vunpack.c.l.bf16 %v813
        %v816 = vmul.f32 %v808, %v814
        %v817 = vmul.f32 %v809, %v815
        %v818 = vpack.c.bf16 %v816, %v816
        %v819 = vpack.c.bf16 %v817, %v817
        %v820 = vunpack.c.l.bf16 %v818
        %v821 = vunpack.c.l.bf16 %v819
        %v822 = vmul.f32 %v820, 0.044677734
        %v823 = vmul.f32 %v821, 0.044677734
        %v824 = vpack.c.bf16 %v822, %v822
        %v825 = vpack.c.bf16 %v823, %v823
        %v826 = vunpack.c.l.bf16 %v824
        %v827 = vunpack.c.l.bf16 %v825
        %v828 = vadd.f32 %v808, %v826
        %v829 = vadd.f32 %v809, %v827
        %v830 = vpack.c.bf16 %v828, %v828
        %v831 = vpack.c.bf16 %v829, %v829
        %v832 = vunpack.c.l.bf16 %v830
        %v833 = vunpack.c.l.bf16 %v831
        %v834 = vmul.f32 %v832, 0.796875
        %v835 = vmul.f32 %v833, 0.796875
        %v836 = vpack.c.bf16 %v834, %v834
        %v837 = vpack.c.bf16 %v835, %v835
        %v838 = vunpack.c.l.bf16 %v836
        %v839 = vunpack.c.l.bf16 %v837
        %v840 = vtanh.pop %v838
        %v841 = vtanh.pop %v839
        %v842 = vpack.c.bf16 %v840, %v840
        %v843 = vpack.c.bf16 %v841, %v841
        %v844 = vunpack.c.l.bf16 %v842
        %v845 = vunpack.c.l.bf16 %v843
        %v846 = vadd.f32 %v844, 1.0
        %v847 = vadd.f32 %v845, 1.0
        %v848 = vpack.c.bf16 %v846, %v846
        %v849 = vpack.c.bf16 %v847, %v847
        %v850 = vunpack.c.l.bf16 %v848
        %v851 = vunpack.c.l.bf16 %v849
        %v852 = vmul.f32 %v850, 0.5
        %v853 = vmul.f32 %v851, 0.5
        %v854 = vpack.c.bf16 %v852, %v852
        %v855 = vpack.c.bf16 %v853, %v853
        %v856 = vunpack.c.l.bf16 %v854
        %v857 = vunpack.c.l.bf16 %v855
        %v858 = vmul.f32 %v808, %v856
        %v859 = vmul.f32 %v809, %v857
        %v860 = vpack.c.bf16 %v859, %v858
        %v861 = vld [vmem:[%s434] sm:$0xff]
        %v862 = vld [vmem:[%s434 + $0x8] sm:$0xff]
        %v863 = vld [vmem:[%s434 + $0x10] sm:$0xff]
        %v864 = vld [vmem:[%s434 + $0x18] sm:$0xff]
        %v865 = vld [vmem:[%s434 + $0x20] sm:$0xff]
        %v866 = vld [vmem:[%s434 + $0x28] sm:$0xff]
        %v867 = vld [vmem:[%s434 + $0x30] sm:$0xff]
        %v868 = vld [vmem:[%s434 + $0x38] sm:$0xff]
        %v869 = vld [vmem:[%s434 + $0x40] sm:$0xff]
        %v870 = vld [vmem:[%s434 + $0x48] sm:$0xff]
        %v871 = vld [vmem:[%s434 + $0x50] sm:$0xff]
        %v872 = vld [vmem:[%s434 + $0x58] sm:$0xff]
        %v873 = vld [vmem:[%s434 + $0x60] sm:$0xff]
        %v874 = vld [vmem:[%s434 + $0x68] sm:$0xff]
        %v875 = vld [vmem:[%s434 + $0x70] sm:$0xff]
        %v876 = vld [vmem:[%s434 + $0x78] sm:$0xff]
        %v893 = vunpack.c.l.b16 %v861
        %v894 = vunpack.c.h.b16 %v861
        %v895 = vunpack.c.l.b16 %v862
        %v896 = vunpack.c.h.b16 %v862
        %v897 = vunpack.c.l.b16 %v863
        %v898 = vunpack.c.h.b16 %v863
        %v899 = vunpack.c.l.b16 %v864
        %v900 = vunpack.c.h.b16 %v864
        %v901 = vunpack.c.l.b16 %v865
        %v902 = vunpack.c.h.b16 %v865
        %v903 = vunpack.c.l.b16 %v866
        %v904 = vunpack.c.h.b16 %v866
        %v905 = vunpack.c.l.b16 %v867
        %v906 = vunpack.c.h.b16 %v867
        %v907 = vunpack.c.l.b16 %v868
        %v908 = vunpack.c.h.b16 %v868
        %v909 = vunpack.c.l.b16 %v869
        %v910 = vunpack.c.h.b16 %v869
        %v911 = vunpack.c.l.b16 %v870
        %v912 = vunpack.c.h.b16 %v870
        %v913 = vunpack.c.l.b16 %v871
        %v914 = vunpack.c.h.b16 %v871
        %v915 = vunpack.c.l.b16 %v872
        %v916 = vunpack.c.h.b16 %v872
        %v917 = vunpack.c.l.b16 %v873
        %v918 = vunpack.c.h.b16 %v873
        %v919 = vunpack.c.l.b16 %v874
        %v920 = vunpack.c.h.b16 %v874
        %v921 = vunpack.c.l.b16 %v875
        %v922 = vunpack.c.h.b16 %v875
        %v923 = vunpack.c.l.b16 %v876
        %v924 = vunpack.c.h.b16 %v876
        %v925 = vpack.c.b16 %v895, %v893
        %v926 = vpack.c.b16 %v896, %v894
        %v927 = vpack.c.b16 %v899, %v897
        %v928 = vpack.c.b16 %v900, %v898
        %v929 = vpack.c.b16 %v903, %v901
        %v930 = vpack.c.b16 %v904, %v902
        %v931 = vpack.c.b16 %v907, %v905
        %v932 = vpack.c.b16 %v908, %v906
        %v933 = vpack.c.b16 %v911, %v909
        %v934 = vpack.c.b16 %v912, %v910
        %v935 = vpack.c.b16 %v915, %v913
        %v936 = vpack.c.b16 %v916, %v914
        %v937 = vpack.c.b16 %v919, %v917
        %v938 = vpack.c.b16 %v920, %v918
        %v939 = vpack.c.b16 %v923, %v921
        %v940 = vpack.c.b16 %v924, %v922
        %957 = vmatpush.bf16.msra.mxu0 %v939
        %958 = vmatpush.bf16.msra.mxu0 %v937
        %959 = vmatpush.bf16.msra.mxu0 %v935
        %960 = vmatpush.bf16.msra.mxu0 %v933
        %961 = vmatpush.bf16.msra.mxu0 %v931
        %962 = vmatpush.bf16.msra.mxu0 %v929
        %963 = vmatpush.bf16.msra.mxu0 %v927
        %964 = vmatpush.bf16.msra.mxu0 %v925
        %965 = vmatmul.bf16.gmra.mxu0 %v860
        %v966 = vpop.f32.mrf.mxu0
        %v967 = vadd.f32 0.0, %v966
        %v968 = vpop.f32.mrf.mxu0
        %v969 = vadd.f32 0.0, %v968
        %970 = vdwg.mxu0
        %971 = vmatpush.bf16.msra.mxu0 %v940
        %972 = vmatpush.bf16.msra.mxu0 %v938
        %973 = vmatpush.bf16.msra.mxu0 %v936
        %974 = vmatpush.bf16.msra.mxu0 %v934
        %975 = vmatpush.bf16.msra.mxu0 %v932
        %976 = vmatpush.bf16.msra.mxu0 %v930
        %977 = vmatpush.bf16.msra.mxu0 %v928
        %978 = vmatpush.bf16.msra.mxu0 %v926
        %979 = vmatmul.bf16.gmra.mxu0 %v860
        %v980 = vpop.f32.mrf.mxu0
        %v981 = vadd.f32 0.0, %v980
        %v982 = vpop.f32.mrf.mxu0
        %v983 = vadd.f32 0.0, %v982
        %984 = vdwg.mxu0
        %v985 = vadd.f32 %v967, %v981
        %986 = vadd.xlane.f32.xlu0 %v985
        %v987 = vpop.xlane.xlu0 %986
        %v988 = vadd.f32 %v969, %v983
        %989 = vadd.xlane.f32.xlu0 %v988
        %v990 = vpop.xlane.xlu0 %989
        %v991 = vrcp.pop 256.0
        %v992 = vmul.f32 256.0, %v991
        %v993 = vsub.f32 1.0, %v992
        %v994 = vmul.f32 %v991, %v993
        %v995 = vadd.f32 %v991, %v994
        %vm996 = vweird.f32 %v991
        %v997 = vsel %vm996, %v991, %v995
        %v998 = vmul.f32 %v987, %v997
        %v999 = vmul.f32 %v990, %v997
        %v1000 = vmul.f32 %v967, %v967
        %v1001 = vmul.f32 %v981, %v981
        %v1002 = vmul.f32 %v969, %v969
        %v1003 = vmul.f32 %v983, %v983
        %v1004 = vadd.f32 %v1000, %v1001
        %1005 = vadd.xlane.f32.xlu0 %v1004
        %v1006 = vpop.xlane.xlu0 %1005
        %v1007 = vadd.f32 %v1002, %v1003
        %1008 = vadd.xlane.f32.xlu0 %v1007
        %v1009 = vpop.xlane.xlu0 %1008
        %v1010 = vmul.f32 %v1006, %v997
        %v1011 = vmul.f32 %v1009, %v997
        %v1012 = vmul.f32 %v998, %v998
        %v1013 = vmul.f32 %v999, %v999
        %v1014 = vsub.f32 %v1010, %v1012
        %v1015 = vsub.f32 %v1011, %v1013
        %v1016 = vsub.f32 %v967, %v998
        %v1017 = vsub.f32 %v981, %v998
        %v1018 = vsub.f32 %v969, %v999
        %v1019 = vsub.f32 %v983, %v999
        %v1020 = vadd.f32 %v1014, 1e-05
        %v1021 = vadd.f32 %v1015, 1e-05
        %v1022 = vrsqrt.pop %v1020
        %v1023 = vmul.f32 %v1022, %v1020
        %v1024 = vmul.f32 %v1023, %v1022
        %v1025 = vmul.f32 0.5, %v1024
        %v1026 = vsub.f32 1.5, %v1025
        %v1027 = vmul.f32 %v1022, %v1026
        %vm1028 = vweird.f32 %v1020
        %vm1029 = vweird.f32 %v1022
        %vm1030 = vmor %vm1028, %vm1029
        %v1031 = vsel %vm1030, %v1022, %v1027
        %v1032 = vrsqrt.pop %v1021
        %v1033 = vmul.f32 %v1032, %v1021
        %v1034 = vmul.f32 %v1033, %v1032
        %v1035 = vmul.f32 0.5, %v1034
        %v1036 = vsub.f32 1.5, %v1035
        %v1037 = vmul.f32 %v1032, %v1036
        %vm1038 = vweird.f32 %v1021
        %vm1039 = vweird.f32 %v1032
        %vm1040 = vmor %vm1038, %vm1039
        %v1041 = vsel %vm1040, %v1032, %v1037
        %v1042 = vmul.f32 %v1016, %v1031
        %v1043 = vmul.f32 %v1017, %v1031
        %v1044 = vmul.f32 %v1018, %v1041
        %v1045 = vmul.f32 %v1019, %v1041
        %v1046 = vpack.c.bf16 %v1043, %v1042
        %v1047 = vpack.c.bf16 %v1045, %v1044
        %v1048 = vld [vmem:[%s524] sm:$0x3]
        %1050 = vst [vmem:[#allocation1] ss:$9 sm:$0xff] %v1048
        %v1051 = vld [vmem:[#allocation1] sm:$0xff]
        %v1052 = vld [vmem:[#allocation1 + $0x9] sm:$0xff]
        %v1053 = vpack.i.b16 %v1051, %v1051
        %v1055 = vperm.slane %v1053, 0
        %v1056 = vpack.i.b16 %v1052, %v1052
        %v1058 = vperm.slane %v1056, 0
        %v1059 = vunpack.c.l.bf16 %v1046
        %v1060 = vunpack.c.h.bf16 %v1046
        %v1061 = vunpack.c.l.bf16 %v1047
        %v1062 = vunpack.c.h.bf16 %v1047
        %v1063 = vunpack.c.l.bf16 %v1055
        %v1064 = vunpack.c.l.bf16 %v1058
        %v1065 = vmul.f32 %v1059, %v1063
        %v1066 = vmul.f32 %v1060, %v1064
        %v1067 = vmul.f32 %v1061, %v1063
        %v1068 = vmul.f32 %v1062, %v1064
        %v1069 = vpack.c.bf16 %v1066, %v1065
        %v1070 = vpack.c.bf16 %v1068, %v1067
        %v1071 = vld [vmem:[%s528] sm:$0x3]
        %1073 = vst [vmem:[#allocation1] ss:$9 sm:$0xff] %v1071
        %v1074 = vld [vmem:[#allocation1] sm:$0xff]
        %v1075 = vld [vmem:[#allocation1 + $0x9] sm:$0xff]
        %v1076 = vpack.i.b16 %v1074, %v1074
        %v1078 = vperm.slane %v1076, 0
        %v1079 = vpack.i.b16 %v1075, %v1075
        %v1081 = vperm.slane %v1079, 0
        %v1082 = vunpack.c.l.bf16 %v1069
        %v1083 = vunpack.c.h.bf16 %v1069
        %v1084 = vunpack.c.l.bf16 %v1070
        %v1085 = vunpack.c.h.bf16 %v1070
        %v1086 = vunpack.c.l.bf16 %v1078
        %v1087 = vunpack.c.l.bf16 %v1081
        %v1088 = vadd.f32 %v1082, %v1086
        %v1089 = vadd.f32 %v1083, %v1087
        %v1090 = vadd.f32 %v1084, %v1086
        %v1091 = vadd.f32 %v1085, %v1087
        %v1092 = vpack.c.bf16 %v1089, %v1088
        %v1093 = vpack.c.bf16 %v1091, %v1090
        %v1094 = vunpack.c.l.bf16 %v1092
        %v1095 = vunpack.c.h.bf16 %v1092
        %v1096 = vunpack.c.l.bf16 %v1093
        %v1097 = vunpack.c.h.bf16 %v1093
        %v1098 = vmul.f32 %v1094, %v1094
        %v1099 = vmul.f32 %v1095, %v1095
        %v1100 = vmul.f32 %v1096, %v1096
        %v1101 = vmul.f32 %v1097, %v1097
        %v1102 = vpack.c.bf16 %v1099, %v1098
        %v1103 = vpack.c.bf16 %v1101, %v1100
        %v1104 = vunpack.c.l.bf16 %v1102
        %v1105 = vunpack.c.h.bf16 %v1102
        %v1106 = vunpack.c.l.bf16 %v1103
        %v1107 = vunpack.c.h.bf16 %v1103
        %v1108 = vmul.f32 %v1094, %v1104
        %v1109 = vmul.f32 %v1095, %v1105
        %v1110 = vmul.f32 %v1096, %v1106
        %v1111 = vmul.f32 %v1097, %v1107
        %v1112 = vpack.c.bf16 %v1109, %v1108
        %v1113 = vpack.c.bf16 %v1111, %v1110
        %v1114 = vunpack.c.l.bf16 %v1112
        %v1115 = vunpack.c.h.bf16 %v1112
        %v1116 = vunpack.c.l.bf16 %v1113
        %v1117 = vunpack.c.h.bf16 %v1113
        %v1118 = vmul.f32 %v1114, 0.044677734
        %v1119 = vmul.f32 %v1115, 0.044677734
        %v1120 = vmul.f32 %v1116, 0.044677734
        %v1121 = vmul.f32 %v1117, 0.044677734
        %v1122 = vpack.c.bf16 %v1119, %v1118
        %v1123 = vpack.c.bf16 %v1121, %v1120
        %v1124 = vunpack.c.l.bf16 %v1122
        %v1125 = vunpack.c.h.bf16 %v1122
        %v1126 = vunpack.c.l.bf16 %v1123
        %v1127 = vunpack.c.h.bf16 %v1123
        %v1128 = vadd.f32 %v1094, %v1124
        %v1129 = vadd.f32 %v1095, %v1125
        %v1130 = vadd.f32 %v1096, %v1126
        %v1131 = vadd.f32 %v1097, %v1127
        %v1132 = vpack.c.bf16 %v1129, %v1128
        %v1133 = vpack.c.bf16 %v1131, %v1130
        %v1134 = vunpack.c.l.bf16 %v1132
        %v1135 = vunpack.c.h.bf16 %v1132
        %v1136 = vunpack.c.l.bf16 %v1133
        %v1137 = vunpack.c.h.bf16 %v1133
        %v1138 = vmul.f32 %v1134, 0.796875
        %v1139 = vmul.f32 %v1135, 0.796875
        %v1140 = vmul.f32 %v1136, 0.796875
        %v1141 = vmul.f32 %v1137, 0.796875
        %v1142 = vpack.c.bf16 %v1139, %v1138
        %v1143 = vpack.c.bf16 %v1141, %v1140
        %v1144 = vunpack.c.l.bf16 %v1142
        %v1145 = vunpack.c.h.bf16 %v1142
        %v1146 = vunpack.c.l.bf16 %v1143
        %v1147 = vunpack.c.h.bf16 %v1143
        %v1148 = vtanh.pop %v1144
        %v1149 = vtanh.pop %v1145
        %v1150 = vtanh.pop %v1146
        %v1151 = vtanh.pop %v1147
        %v1152 = vpack.c.bf16 %v1149, %v1148
        %v1153 = vpack.c.bf16 %v1151, %v1150
        %v1154 = vunpack.c.l.bf16 %v1152
        %v1155 = vunpack.c.h.bf16 %v1152
        %v1156 = vunpack.c.l.bf16 %v1153
        %v1157 = vunpack.c.h.bf16 %v1153
        %v1158 = vadd.f32 %v1154, 1.0
        %v1159 = vadd.f32 %v1155, 1.0
        %v1160 = vadd.f32 %v1156, 1.0
        %v1161 = vadd.f32 %v1157, 1.0
        %v1162 = vpack.c.bf16 %v1159, %v1158
        %v1163 = vpack.c.bf16 %v1161, %v1160
        %v1164 = vunpack.c.l.bf16 %v1162
        %v1165 = vunpack.c.h.bf16 %v1162
        %v1166 = vunpack.c.l.bf16 %v1163
        %v1167 = vunpack.c.h.bf16 %v1163
        %v1168 = vmul.f32 %v1164, 0.5
        %v1169 = vmul.f32 %v1165, 0.5
        %v1170 = vmul.f32 %v1166, 0.5
        %v1171 = vmul.f32 %v1167, 0.5
        %v1172 = vpack.c.bf16 %v1169, %v1168
        %v1173 = vpack.c.bf16 %v1171, %v1170
        %v1174 = vunpack.c.l.bf16 %v1172
        %v1175 = vunpack.c.h.bf16 %v1172
        %v1176 = vunpack.c.l.bf16 %v1173
        %v1177 = vunpack.c.h.bf16 %v1173
        %v1178 = vmul.f32 %v1094, %v1174
        %v1179 = vmul.f32 %v1095, %v1175
        %v1180 = vmul.f32 %v1096, %v1176
        %v1181 = vmul.f32 %v1097, %v1177
        %v1182 = vpack.c.bf16 %v1180, %v1178
        %v1183 = vpack.c.bf16 %v1181, %v1179
        %v1184 = vld [vmem:[%s444] sm:$0xf]
        %v1185 = vld [vmem:[%s444 + $0x4] sm:$0xf]
        %v1186 = vld [vmem:[%s444 + $0x8] sm:$0xf]
        %v1187 = vld [vmem:[%s444 + $0xc] sm:$0xf]
        %v1188 = vld [vmem:[%s444 + $0x10] sm:$0xf]
        %v1189 = vld [vmem:[%s444 + $0x14] sm:$0xf]
        %v1190 = vld [vmem:[%s444 + $0x18] sm:$0xf]
        %v1191 = vld [vmem:[%s444 + $0x1c] sm:$0xf]
        %v1192 = vld [vmem:[%s444 + $0x20] sm:$0xf]
        %v1193 = vld [vmem:[%s444 + $0x24] sm:$0xf]
        %v1194 = vld [vmem:[%s444 + $0x28] sm:$0xf]
        %v1195 = vld [vmem:[%s444 + $0x2c] sm:$0xf]
        %v1196 = vld [vmem:[%s444 + $0x30] sm:$0xf]
        %v1197 = vld [vmem:[%s444 + $0x34] sm:$0xf]
        %v1198 = vld [vmem:[%s444 + $0x38] sm:$0xf]
        %v1199 = vld [vmem:[%s444 + $0x3c] sm:$0xf]
        %v1200 = vld [vmem:[%s444 + $0x40] sm:$0xf]
        %v1201 = vld [vmem:[%s444 + $0x44] sm:$0xf]
        %v1202 = vld [vmem:[%s444 + $0x48] sm:$0xf]
        %v1203 = vld [vmem:[%s444 + $0x4c] sm:$0xf]
        %v1204 = vld [vmem:[%s444 + $0x50] sm:$0xf]
        %v1205 = vld [vmem:[%s444 + $0x54] sm:$0xf]
        %v1206 = vld [vmem:[%s444 + $0x58] sm:$0xf]
        %v1207 = vld [vmem:[%s444 + $0x5c] sm:$0xf]
        %v1208 = vld [vmem:[%s444 + $0x60] sm:$0xf]
        %v1209 = vld [vmem:[%s444 + $0x64] sm:$0xf]
        %v1210 = vld [vmem:[%s444 + $0x68] sm:$0xf]
        %v1211 = vld [vmem:[%s444 + $0x6c] sm:$0xf]
        %v1212 = vld [vmem:[%s444 + $0x70] sm:$0xf]
        %v1213 = vld [vmem:[%s444 + $0x74] sm:$0xf]
        %v1214 = vld [vmem:[%s444 + $0x78] sm:$0xf]
        %v1215 = vld [vmem:[%s444 + $0x7c] sm:$0xf]
        %v1216 = vld [vmem:[%s531] sm:$0x1]
        %v1218 = vperm.slane %v1216, 0
        %v1252 = vunpack.c.l.b16 %v1184
        %v1253 = vunpack.c.l.b16 %v1185
        %v1254 = vunpack.c.l.b16 %v1186
        %v1255 = vunpack.c.l.b16 %v1187
        %v1256 = vunpack.c.l.b16 %v1188
        %v1257 = vunpack.c.l.b16 %v1189
        %v1258 = vunpack.c.l.b16 %v1190
        %v1259 = vunpack.c.l.b16 %v1191
        %v1260 = vunpack.c.l.b16 %v1192
        %v1261 = vunpack.c.l.b16 %v1193
        %v1262 = vunpack.c.l.b16 %v1194
        %v1263 = vunpack.c.l.b16 %v1195
        %v1264 = vunpack.c.l.b16 %v1196
        %v1265 = vunpack.c.l.b16 %v1197
        %v1266 = vunpack.c.l.b16 %v1198
        %v1267 = vunpack.c.l.b16 %v1199
        %v1268 = vunpack.c.l.b16 %v1200
        %v1269 = vunpack.c.l.b16 %v1201
        %v1270 = vunpack.c.l.b16 %v1202
        %v1271 = vunpack.c.l.b16 %v1203
        %v1272 = vunpack.c.l.b16 %v1204
        %v1273 = vunpack.c.l.b16 %v1205
        %v1274 = vunpack.c.l.b16 %v1206
        %v1275 = vunpack.c.l.b16 %v1207
        %v1276 = vunpack.c.l.b16 %v1208
        %v1277 = vunpack.c.l.b16 %v1209
        %v1278 = vunpack.c.l.b16 %v1210
        %v1279 = vunpack.c.l.b16 %v1211
        %v1280 = vunpack.c.l.b16 %v1212
        %v1281 = vunpack.c.l.b16 %v1213
        %v1282 = vunpack.c.l.b16 %v1214
        %v1283 = vunpack.c.l.b16 %v1215
        %v1284 = vpack.c.b16 %v1253, %v1252
        %v1285 = vpack.c.b16 %v1255, %v1254
        %v1286 = vpack.c.b16 %v1257, %v1256
        %v1287 = vpack.c.b16 %v1259, %v1258
        %v1288 = vpack.c.b16 %v1261, %v1260
        %v1289 = vpack.c.b16 %v1263, %v1262
        %v1290 = vpack.c.b16 %v1265, %v1264
        %v1291 = vpack.c.b16 %v1267, %v1266
        %v1292 = vpack.c.b16 %v1269, %v1268
        %v1293 = vpack.c.b16 %v1271, %v1270
        %v1294 = vpack.c.b16 %v1273, %v1272
        %v1295 = vpack.c.b16 %v1275, %v1274
        %v1296 = vpack.c.b16 %v1277, %v1276
        %v1297 = vpack.c.b16 %v1279, %v1278
        %v1298 = vpack.c.b16 %v1281, %v1280
        %v1299 = vpack.c.b16 %v1283, %v1282
        %1316 = vmatpush.bf16.msra.mxu0 %v1291
        %1317 = vmatpush.bf16.msra.mxu0 %v1290
        %1318 = vmatpush.bf16.msra.mxu0 %v1289
        %1319 = vmatpush.bf16.msra.mxu0 %v1288
        %1320 = vmatpush.bf16.msra.mxu0 %v1287
        %1321 = vmatpush.bf16.msra.mxu0 %v1286
        %1322 = vmatpush.bf16.msra.mxu0 %v1285
        %1323 = vmatpush.bf16.msra.mxu0 %v1284
        %1324 = vmatmul.bf16.gmra.mxu0 %v1182
        %v1325 = vpop.f32.mrf.mxu0
        %v1326 = vadd.f32 %v1218, %v1325
        %v1327 = vpop.f32.mrf.mxu0
        %v1328 = vadd.f32 %v1218, %v1327
        %1329 = vdwg.mxu0
        %1330 = vmatpush.bf16.msra.mxu0 %v1299
        %1331 = vmatpush.bf16.msra.mxu0 %v1298
        %1332 = vmatpush.bf16.msra.mxu0 %v1297
        %1333 = vmatpush.bf16.msra.mxu0 %v1296
        %1334 = vmatpush.bf16.msra.mxu0 %v1295
        %1335 = vmatpush.bf16.msra.mxu0 %v1294
        %1336 = vmatpush.bf16.msra.mxu0 %v1293
        %1337 = vmatpush.bf16.msra.mxu0 %v1292
        %1338 = vmatmul.bf16.gmra.mxu0 %v1183
        %v1339 = vpop.f32.mrf.mxu0
        %v1340 = vadd.f32 %v1326, %v1339
        %v1341 = vpop.f32.mrf.mxu0
        %v1342 = vadd.f32 %v1328, %v1341
        %1343 = vdwg.mxu0
        %v1344 = vlaneseq
        %v1345 = vand.u32 %v1344, 127
        %v1346 = vstv %s35
        %vm1347 = vcmp.eq.s32.totalorder %v1345, %v1346
        %v1348 = vld [vmem:[#allocation4] sm:$0xff]
        %v1349 = vld [vmem:[#allocation4 + $0x8] sm:$0xff]
        %v1350 = vsel %vm1347, %v1348, 0.0
        %v1351 = vsel %vm1347, %v1349, 0.0
        %vm1352 = vcmask 31744
        %v1353 = vsel %vm1352, %v1350, 0.0
        %1354 = vadd.xlane.f32.xlu0 %v1353
        %v1355 = vpop.xlane.xlu0 %1354
        %v1356 = vsel %vm1352, %v1351, 0.0
        %1357 = vadd.xlane.f32.xlu0 %v1356
        %v1358 = vpop.xlane.xlu0 %1357
        %v1359 = vld [vmem:[#allocation2] sm:$0xff]
        %v1360 = vld [vmem:[#allocation2 + $0x8] sm:$0xff]
        %v1361 = vmul.f32 %v1355, %v1340
        %v1362 = vmul.f32 %v1358, %v1342
        %v1363 = vadd.f32 %v1359, %v1361
        %v1364 = vadd.f32 %v1360, %v1362
        %1365 = vst [vmem:[#allocation2] sm:$0xff] %v1363
        %1366 = vst [vmem:[#allocation2 + $0x8] sm:$0xff] %v1364
        %p1367 = scmp.eq.s32.totalorder %s35, 3
        // Predicated region
        $region73: #{tpu_custom_call.1} parent=59 // pred_check
          %p1368 = pneg %p1367
        $region74: #{tpu_custom_call.1} parent=59 // pred_check_branch
          %1370 = sbr.rel (%p1368) target = $region76
        $region75: #{tpu_custom_call.1} parent=59 // pred_region
          %v1371 = vld [vmem:[#allocation2] sm:$0xff]
          %v1372 = vld [vmem:[#allocation2 + $0x8] sm:$0xff]
          %1373 = vst [vmem:[%s508] sm:$0xff] %v1371
          %1374 = vst [vmem:[%s508 + $0x8] sm:$0xff] %v1372
        $region76: #{tpu_custom_call.1} parent=59 // pred_fallthru
          _
        %s1375 = sand.u32 %s300, 1
        %s1376 = scalar_lea.sflag [#allocation7], %s1375
        %s1377 = sand.u32 %s300, 1
        %s1378 = smul.addr %s1377, 16
        %s1379 = scalar_lea.vmem [#allocation10], %s1378
        // Predicated region
        $region77: #{tpu_custom_call.1} parent=59 // pred_check
          %p1380 = pneg %p310
        $region78: #{tpu_custom_call.1} parent=59 // pred_check_branch
          %1382 = sbr.rel (%p1380) target = $region80
        $region79: #{tpu_custom_call.1} parent=59 // pred_region
          %s1383 = smul.u32 2, %s34
          %1385 = vsyncadd %s1376, 0
          %s1386 = smul.addr %s1383, 8
          %s1387 = scalar_lea.hbm %s10, %s1386
          %s1388 = sshll.u32 %s1379, 4
          %s1389 = int_to_ptr.vmem [resolvable:$true] %s1388
          %s1390 = sshll.u32 %s1387, 4
          %s1391 = int_to_ptr.hbm [resolvable:$true] %s1390
          %1396 = dma.vmem_to_hbm [thread:$0]  %s1389, 256, %s1391, %s1376, 128, 128, 8
        $region80: #{tpu_custom_call.1} parent=59 // pred_fallthru
          _
      $region60: #{tpu_custom_call.1} parent=5 // pred_fallthru
        _
      %p1397 = scmp.le.s32.totalorder 2, %s25
      // Predicated region
      $region81: #{tpu_custom_call.1} parent=5 // pred_check
        %p1398 = pneg %p1397
      $region82: #{tpu_custom_call.1} parent=5 // pred_check_branch
        %1400 = sbr.rel (%p1398) target = $region84
      $region83: #{tpu_custom_call.1} parent=5 // pred_region
        %s1401 = ssub.s32 %s25, 2
        // Predicated region
        $region85: #{tpu_custom_call.1} parent=83 // pred_check
          %p1402 = pneg %p316
        $region86: #{tpu_custom_call.1} parent=83 // pred_check_branch
          %1404 = sbr.rel (%p1402) target = $region88
        $region87: #{tpu_custom_call.1} parent=83 // pred_region
          %s1405 = sand.u32 %s301, 1
          %s1406 = scalar_lea.sflag [#allocation7], %s1405
          %s1407 = sand.u32 %s301, 1
          %s1408 = smul.addr %s1407, 16
          %s1409 = scalar_lea.vmem [#allocation10], %s1408
          %1411 = dma.done %s1406, 256
        $region88: #{tpu_custom_call.1} parent=83 // pred_fallthru
          _
      $region84: #{tpu_custom_call.1} parent=5 // pred_fallthru
        _
    $region6: #{tpu_custom_call.1} parent=1 // loop_footer
      %s29 = sadd.s32 1, %s25
    $region7: #{tpu_custom_call.1} parent=1 // loop_footer_branch
      %24 = sbr.rel target = $region3
    $region8: #{tpu_custom_call.1} parent=1 // loop_exit
      _
    %1412 = vsyncpa [#allocation6], 1
    %s1413 = scalar_lea.sflag [#allocation6], 1
    %1414 = vsyncpa %s1413, 1
    %1415 = vsyncpa [#allocation9], 1
    %s1416 = scalar_lea.sflag [#allocation9], 1
    %1417 = vsyncpa %s1416, 1
    %1418 = vsyncpa [#allocation7], 1
    %s1419 = scalar_lea.sflag [#allocation7], 1
    %1420 = vsyncpa %s1419, 1

</llo_original>
